<compile_context>
chip_gen: v7x
topology: tpu7x:2x2x1
jax: 0.10.0
libtpu: 0.0.40
codegen_flags: <defaults>
</compile_context>

<pallas_src>
import functools

import jax
import jax.numpy as jnp
import numpy as np
from jax import lax
from jax.experimental import pallas as pl
from jax.experimental.pallas import tpu as pltpu


def _round_up(x, m):
    return ((x + m - 1) // m) * m


def _largest_divisor_leq(n, cap):
    cap = max(1, min(n, cap))
    for d in range(cap, 0, -1):
        if n % d == 0:
            return d
    return 1


# ---------------------------------------------------------------------------
# Kernel
# ---------------------------------------------------------------------------
def _fused_lstm_fc_kernel(gx0_ref, w0hh_ref, wstk_ref, bstk_ref,
                          h0_ref, c0_ref, fcw_ref, fcb_ref,
                          out_ref, h_sc, c_sc):
    """Grid = (batch_tiles, time_chunks).

    Refs (per grid step):
      gx0_ref  (Tc, Bt, 4Hp) bf16  streamed layer-0 gates (input proj + bias)
      w0hh_ref (Hp, 4Hp)     bf16  layer-0 hidden-to-hidden weight (transposed)
      wstk_ref (L-1, 2Hp, 4Hp) bf16  stacked [W_ih; W_hh]^T for layers >= 1
      bstk_ref (L-1, 1, 4Hp) f32   b_ih + b_hh for layers >= 1
      h0_ref, c0_ref (L, Bt, Hp) f32  initial states (this batch tile)
      fcw_ref  (Hp, Dout)    bf16  final Linear weight (transposed)
      fcb_ref  (1, Dout)     f32   final Linear bias
      out_ref  (Bt, Dout)    f32   output (written at last time chunk only)
      h_sc, c_sc (L, Bt, Hp) f32   recurrent state carried across time chunks
    """
    L = h0_ref.shape[0]
    Hp = w0hh_ref.shape[0]
    Tc = gx0_ref.shape[0]

    t_idx = pl.program_id(1)

    # Reset the carried state at the first time chunk of this batch tile.
    @pl.when(t_idx == 0)
    def _():
        h_sc[...] = h0_ref[...]
        c_sc[...] = c0_ref[...]

    def cell(gates, c_prev):
        # Gate order [i, f, g, o], matching torch.nn.LSTM.  Slices are
        # 128-lane aligned (Hp % 128 == 0) -> free views.
        i_g = jax.nn.sigmoid(gates[:, 0 * Hp:1 * Hp])
        f_g = jax.nn.sigmoid(gates[:, 1 * Hp:2 * Hp])
        g_g = jnp.tanh(gates[:, 2 * Hp:3 * Hp])
        o_g = jax.nn.sigmoid(gates[:, 3 * Hp:4 * Hp])
        c_new = f_g * c_prev + i_g * g_g
        h_new = o_g * jnp.tanh(c_new)
        return h_new, c_new

    # Load carried state (small: (Bt, Hp) per layer) into vregs for the chunk.
    init = tuple(h_sc[l] for l in range(L)) + tuple(c_sc[l] for l in range(L))

    def step(s, carry):
        hs = list(carry[:L])
        cs = list(carry[L:])
        # Layer 0: input projection was hoisted out of the recurrence; only
        # the hidden-to-hidden matmul remains on the serial critical path.
        # Weight refs are indexed inside the loop (no hoisted live values).
        gates0 = (gx0_ref[s].astype(jnp.float32)
                  + jnp.dot(hs[0].astype(jnp.bfloat16), w0hh_ref[...],
                            preferred_element_type=jnp.float32))
        hs[0], cs[0] = cell(gates0, cs[0])
        # Layers >= 1: single fused matmul [h_{l-1}, h_l] @ [W_ih; W_hh]^T.
        for l in range(1, L):
            hcat = jnp.concatenate([hs[l - 1], hs[l]],
                                   axis=-1).astype(jnp.bfloat16)
            gates = (jnp.dot(hcat, wstk_ref[l - 1],
                             preferred_element_type=jnp.float32)
                     + bstk_ref[l - 1])
            hs[l], cs[l] = cell(gates, cs[l])
        return tuple(hs) + tuple(cs)

    final = lax.fori_loop(0, Tc, step, init, unroll=min(Tc, 8))

    # Persist state for the next time chunk.
    for l in range(L):
        h_sc[l] = final[l]
        c_sc[l] = final[L + l]

    # Final FC (dropout before it = identity), fused; single small store.
    @pl.when(t_idx == pl.num_programs(1) - 1)
    def _():
        h_top = final[L - 1].astype(jnp.bfloat16)
        out_ref[...] = (jnp.dot(h_top, fcw_ref[...],
                                preferred_element_type=jnp.float32)
                        + fcb_ref[...]).astype(out_ref.dtype)


# ---------------------------------------------------------------------------
# Wrapper
# ---------------------------------------------------------------------------
@functools.partial(jax.jit, static_argnames=("time_chunk",))
def lstm_forward(packed, x, h0, c0, *, time_chunk=None):
    """Mirrors LSTM.forward (eval mode).

    x:      (batch, input_size, seq)   -- same layout the PyTorch module takes
    h0, c0: (num_layers, batch, hidden)
    returns: (batch, output_size) float32
    """
    x_tm = jnp.transpose(x, (2, 0, 1))                     # (S, B, Din)
    S, B, _ = x_tm.shape
    L, _, H = h0.shape
    Hp = packed["w0hh"].shape[0]
    Dout = packed["fc_w"].shape[1]
    Lm1 = packed["w_stk"].shape[0]

    # Batch padding / tiling: >= 8 sublanes; tile by 128 for large B so the
    # leading "parallel" grid axis can spread batch tiles over TensorCores.
    if B <= 128:
        Bp = max(8, _round_up(B, 8))
        Bt = Bp
    else:
        Bt = 128
        Bp = _round_up(B, Bt)
    nb = Bp // Bt

    # Hoist the layer-0 input projection out of the recurrence: one parallel
    # (S*B, Din) x (Din, 4Hp) matmul in plain XLA, bias folded once.
    gx0 = (jnp.einsum("sbd,dg->sbg", x_tm, packed["wih0_t"])
           + packed["bias0"])                              # (S, B, 4Hp) f32
    gx0 = jnp.pad(gx0, ((0, 0), (0, Bp - B), (0, 0))).astype(jnp.bfloat16)

    h0p = jnp.pad(h0.astype(jnp.float32), ((0, 0), (0, Bp - B), (0, Hp - H)))
    c0p = jnp.pad(c0.astype(jnp.float32), ((0, 0), (0, Bp - B), (0, Hp - H)))

    # Time chunk: keep each double-buffered gx0 window <= ~4 MiB per buffer.
    if time_chunk is None:
        per_step_bytes = Bt * 4 * Hp * 2                   # one step, bf16
        cap = max(1, (4 * 1024 * 1024) // per_step_bytes)
        Tc = _largest_divisor_leq(S, min(cap, 128))
    else:
        Tc = _largest_divisor_leq(S, int(time_chunk))
    nt = S // Tc

    # Resident VMEM estimate (inputs double-buffered) -> scoped limit.
    est = (2 * Tc * Bt * 4 * Hp * 2                        # gx0 double buffer
           + 2 * (Hp * 4 * Hp + Lm1 * 2 * Hp * 4 * Hp + Hp * Dout) * 2
           + 2 * (Lm1 * 4 * Hp + Dout) * 4
           + 2 * 2 * L * Bt * Hp * 4                       # h0/c0 blocks
           + 2 * L * Bt * Hp * 4                           # scratch
           + 2 * Bt * Dout * 4)
    vmem_limit = int(min(100 * 2 ** 20, max(32 * 2 ** 20, int(est * 1.5))))

    grid_spec = pltpu.PrefetchScalarGridSpec(
        num_scalar_prefetch=0,
        grid=(nb, nt),
        in_specs=[
            pl.BlockSpec((Tc, Bt, 4 * Hp), lambda b, t: (t, b, 0)),   # gx0
            pl.BlockSpec((Hp, 4 * Hp), lambda b, t: (0, 0)),          # w0hh
            pl.BlockSpec((Lm1, 2 * Hp, 4 * Hp), lambda b, t: (0, 0, 0)),
            pl.BlockSpec((Lm1, 1, 4 * Hp), lambda b, t: (0, 0, 0)),
            pl.BlockSpec((L, Bt, Hp), lambda b, t: (0, b, 0)),        # h0
            pl.BlockSpec((L, Bt, Hp), lambda b, t: (0, b, 0)),        # c0
            pl.BlockSpec((Hp, Dout), lambda b, t: (0, 0)),            # fc_w
            pl.BlockSpec((1, Dout), lambda b, t: (0, 0)),             # fc_b
        ],
        out_specs=pl.BlockSpec((Bt, Dout), lambda b, t: (b, 0)),
        scratch_shapes=[pltpu.VMEM((L, Bt, Hp), jnp.float32),
                        pltpu.VMEM((L, Bt, Hp), jnp.float32)],
    )

    out = pl.pallas_call(
        _fused_lstm_fc_kernel,
        out_shape=jax.ShapeDtypeStruct((Bp, Dout), jnp.float32),
        grid_spec=grid_spec,
        compiler_params=pltpu.CompilerParams(
            dimension_semantics=("parallel", "arbitrary"),
            vmem_limit_bytes=vmem_limit),
    )(gx0, packed["w0hh"], packed["w_stk"], packed["b_stk"],
      h0p, c0p, packed["fc_w"], packed["fc_b"])

    return out[:B]


# ---------------------------------------------------------------------------
# Parameter init / packing
# ---------------------------------------------------------------------------
def init_params(key, input_size, hidden_size, num_layers, output_size):
    """Deterministic parameter init (uniform in +-1/sqrt(H), like PyTorch)."""
    params = {}
    bound = 1.0 / float(np.sqrt(hidden_size))
    keys = jax.random.split(key, num_layers * 4 + 2)
    k_idx = 0
    for layer in range(num_layers):
        in_dim = input_size if layer == 0 else hidden_size
        w_ih = jax.random.uniform(keys[k_idx], (4 * hidden_size, in_dim),
                                  jnp.float32, -bound, bound); k_idx += 1
        w_hh = jax.random.uniform(keys[k_idx], (4 * hidden_size, hidden_size),
                                  jnp.float32, -bound, bound); k_idx += 1
        b_ih = jax.random.uniform(keys[k_idx], (4 * hidden_size,),
                                  jnp.float32, -bound, bound); k_idx += 1
        b_hh = jax.random.uniform(keys[k_idx], (4 * hidden_size,),
                                  jnp.float32, -bound, bound); k_idx += 1
        params[f"l{layer}"] = {
            "wih_t": w_ih.T,                                    # (in_dim, 4H)
            "whh_t": w_hh.T,                                    # (H, 4H)
            "bias": (b_ih + b_hh).reshape(1, 4 * hidden_size),  # (1, 4H)
        }
    w_fc = jax.random.uniform(keys[k_idx], (output_size, hidden_size),
                              jnp.float32, -bound, bound); k_idx += 1
    b_fc = jax.random.uniform(keys[k_idx], (output_size,),
                              jnp.float32, -bound, bound)
    params["fc"] = {"w_t": w_fc.T, "b": b_fc.reshape(1, output_size)}
    return params


def pack_params(params, input_size, hidden_size, num_layers, output_size):
    """Pad H to 128-lane multiples, stack [W_ih; W_hh] per layer, cast bf16."""
    H = hidden_size
    Hp = _round_up(max(H, 128), 128)

    def pad_gates(a):                     # (..., 4H) -> (..., 4Hp)
        parts = [a[..., k * H:(k + 1) * H] for k in range(4)]
        widths = [(0, 0)] * (a.ndim - 1) + [(0, Hp - H)]
        return jnp.concatenate([jnp.pad(p, widths) for p in parts], axis=-1)

    def pad_rows(a):                      # (H, X) -> (Hp, X)
        return jnp.pad(a, ((0, Hp - H), (0, 0)))

    p0 = params["l0"]
    packed = {
        "wih0_t": pad_gates(p0["wih_t"]).astype(jnp.float32),   # (Din, 4Hp)
        "bias0": pad_gates(p0["bias"]).astype(jnp.float32),     # (1, 4Hp)
        "w0hh": pad_gates(pad_rows(p0["whh_t"])).astype(jnp.bfloat16),
    }
    if num_layers > 1:
        w_stk, b_stk = [], []
        for l in range(1, num_layers):
            pl_ = params[f"l{l}"]
            w2h = jnp.concatenate([pad_rows(pl_["wih_t"]),
                                   pad_rows(pl_["whh_t"])], axis=0)  # (2Hp,4H)
            w_stk.append(pad_gates(w2h))
            b_stk.append(pad_gates(pl_["bias"]))
        packed["w_stk"] = jnp.stack(w_stk).astype(jnp.bfloat16)  # (L-1,2Hp,4Hp)
        packed["b_stk"] = jnp.stack(b_stk).astype(jnp.float32)   # (L-1,1,4Hp)
    else:
        packed["w_stk"] = jnp.zeros((1, 2 * Hp, 4 * Hp), jnp.bfloat16)
        packed["b_stk"] = jnp.zeros((1, 1, 4 * Hp), jnp.float32)
    packed["fc_w"] = jnp.pad(params["fc"]["w_t"],
                             ((0, Hp - H), (0, 0))).astype(jnp.bfloat16)
    packed["fc_b"] = params["fc"]["b"].astype(jnp.float32)
    return packed


# ---------------------------------------------------------------------------
# Pure-JAX reference (torch.nn.LSTM eval-mode semantics + Linear)
# ---------------------------------------------------------------------------
def lstm_reference(params, x, h0, c0, num_layers):
    x_bt = jnp.transpose(x, (0, 2, 1))            # (batch, seq, in)
    B, S, _ = x_bt.shape
    H = h0.shape[-1]
    layer_in = x_bt
    for l in range(num_layers):
        p = params[f"l{l}"]
        h, c = h0[l], c0[l]
        outs = []
        for t in range(S):
            gates = layer_in[:, t, :] @ p["wih_t"] + h @ p["whh_t"] + p["bias"]
            i_g = jax.nn.sigmoid(gates[:, 0 * H:1 * H])
            f_g = jax.nn.sigmoid(gates[:, 1 * H:2 * H])
            g_g = jnp.tanh(gates[:, 2 * H:3 * H])
            o_g = jax.nn.sigmoid(gates[:, 3 * H:4 * H])
            c = f_g * c + i_g * g_g
            h = o_g * jnp.tanh(c)
            outs.append(h)
        layer_in = jnp.stack(outs, axis=1)
    return layer_in[:, -1, :] @ params["fc"]["w_t"] + params["fc"]["b"]


if __name__ == "__main__":
    batch, input_size, seq = 2, 4, 8
    hidden_size, num_layers, output_size = 32, 2, 3

    key = jax.random.PRNGKey(0)
    k_param, k_x, k_h, k_c = jax.random.split(key, 4)

    params = init_params(k_param, input_size, hidden_size, num_layers,
                         output_size)
    packed = pack_params(params, input_size, hidden_size, num_layers,
                         output_size)

    # Module input: (batch, input_size, seq); forward transposes internally.
    x = jax.random.normal(k_x, (batch, input_size, seq), jnp.float32)

    # _init_hidden_cell: randn * 0.1 (made deterministic via PRNGKey)
    init_weight = 0.1
    h0 = jax.random.normal(k_h, (num_layers, batch, hidden_size),
                           jnp.float32) * init_weight
    c0 = jax.random.normal(k_c, (num_layers, batch, hidden_size),
                           jnp.float32) * init_weight

    out = lstm_forward(packed, x, h0, c0, time_chunk=4)   # 2 streamed chunks
    jax.block_until_ready(out)
    assert out.shape == (batch, output_size), out.shape

    ref = lstm_reference(params, x, h0, c0, num_layers)
    np.testing.assert_allclose(np.asarray(out), np.asarray(ref),
                               rtol=2e-2, atol=2e-2)
    print("KERNEL_OK")
</pallas_src>

<mosaic_0001>
module attributes {stable_mosaic.version = 11 : i64} {
  func.func @_fused_lstm_fc_kernel(%arg0: i32, %arg1: i32, %arg2: memref<4x8x512xbf16, #tpu.memory_space<vmem>>, %arg3: memref<128x512xbf16, #tpu.memory_space<vmem>>, %arg4: memref<1x256x512xbf16, #tpu.memory_space<vmem>>, %arg5: memref<1x1x512xf32, #tpu.memory_space<vmem>>, %arg6: memref<2x8x128xf32, #tpu.memory_space<vmem>>, %arg7: memref<2x8x128xf32, #tpu.memory_space<vmem>>, %arg8: memref<128x3xbf16, #tpu.memory_space<vmem>>, %arg9: memref<1x3xf32, #tpu.memory_space<vmem>>, %arg10: memref<8x3xf32, #tpu.memory_space<vmem>>, %arg11: memref<2x8x128xf32, #tpu.memory_space<vmem>>, %arg12: memref<2x8x128xf32, #tpu.memory_space<vmem>>) attributes {dimension_semantics = [#tpu.dimension_semantics<parallel>, #tpu.dimension_semantics<arbitrary>], iteration_bounds = array<i64: 1, 2>, scalar_prefetch = 0 : i64, scratch_operands = 2 : i64, tpu.core_type = #tpu.core_type<tc>, window_params = [{transform_indices = @transform_0, window_bounds = array<i64: 4, 8, 512>}, {pipeline_mode = #tpu.pipeline_mode<synchronous>, transform_indices = @transform_1, window_bounds = array<i64: 128, 512>}, {pipeline_mode = #tpu.pipeline_mode<synchronous>, transform_indices = @transform_2, window_bounds = array<i64: 1, 256, 512>}, {pipeline_mode = #tpu.pipeline_mode<synchronous>, transform_indices = @transform_3, window_bounds = array<i64: 1, 1, 512>}, {transform_indices = @transform_4, window_bounds = array<i64: 2, 8, 128>}, {transform_indices = @transform_5, window_bounds = array<i64: 2, 8, 128>}, {pipeline_mode = #tpu.pipeline_mode<synchronous>, transform_indices = @transform_6, window_bounds = array<i64: 128, 3>}, {pipeline_mode = #tpu.pipeline_mode<synchronous>, transform_indices = @transform_7, window_bounds = array<i64: 1, 3>}, {transform_indices = @transform_8, window_bounds = array<i64: 8, 3>}]} {
    %c0_i32 = arith.constant 0 : i32
    %0 = arith.cmpi eq, %arg1, %c0_i32 : i32
    %1 = arith.extui %0 : i1 to i32
    %c0_i32_0 = arith.constant 0 : i32
    %2 = arith.cmpi ne, %1, %c0_i32_0 : i32
    scf.if %2 {
      %c0_97 = arith.constant 0 : index
      %c0_98 = arith.constant 0 : index
      %c0_99 = arith.constant 0 : index
      %294 = vector.load %arg6[%c0_97, %c0_98, %c0_99] : memref<2x8x128xf32, #tpu.memory_space<vmem>>, vector<2x8x128xf32>
      %c0_100 = arith.constant 0 : index
      %c0_101 = arith.constant 0 : index
      %c0_102 = arith.constant 0 : index
      %295 = vector.load %arg11[%c0_100, %c0_101, %c0_102] : memref<2x8x128xf32, #tpu.memory_space<vmem>>, vector<2x8x128xf32>
      tpu.vector_store %arg11[%c0_100, %c0_101, %c0_102], %294 {strides = array<i32>} : memref<2x8x128xf32, #tpu.memory_space<vmem>>, vector<2x8x128xf32>,
      %c0_103 = arith.constant 0 : index
      %c0_104 = arith.constant 0 : index
      %c0_105 = arith.constant 0 : index
      %296 = vector.load %arg7[%c0_103, %c0_104, %c0_105] : memref<2x8x128xf32, #tpu.memory_space<vmem>>, vector<2x8x128xf32>
      %c0_106 = arith.constant 0 : index
      %c0_107 = arith.constant 0 : index
      %c0_108 = arith.constant 0 : index
      %297 = vector.load %arg12[%c0_106, %c0_107, %c0_108] : memref<2x8x128xf32, #tpu.memory_space<vmem>>, vector<2x8x128xf32>
      tpu.vector_store %arg12[%c0_106, %c0_107, %c0_108], %296 {strides = array<i32>} : memref<2x8x128xf32, #tpu.memory_space<vmem>>, vector<2x8x128xf32>,
    } else {
    }
    %c0 = arith.constant 0 : index
    %c0_1 = arith.constant 0 : index
    %c0_2 = arith.constant 0 : index
    %3 = vector.load %arg11[%c0, %c0_1, %c0_2] : memref<2x8x128xf32, #tpu.memory_space<vmem>>, vector<1x8x128xf32>
    %4 = vector.shape_cast %3 : vector<1x8x128xf32> to vector<8x128xf32>
    %c1 = arith.constant 1 : index
    %c0_3 = arith.constant 0 : index
    %c0_4 = arith.constant 0 : index
    %5 = vector.load %arg11[%c1, %c0_3, %c0_4] : memref<2x8x128xf32, #tpu.memory_space<vmem>>, vector<1x8x128xf32>
    %6 = vector.shape_cast %5 : vector<1x8x128xf32> to vector<8x128xf32>
    %c0_5 = arith.constant 0 : index
    %c0_6 = arith.constant 0 : index
    %c0_7 = arith.constant 0 : index
    %7 = vector.load %arg12[%c0_5, %c0_6, %c0_7] : memref<2x8x128xf32, #tpu.memory_space<vmem>>, vector<1x8x128xf32>
    %8 = vector.shape_cast %7 : vector<1x8x128xf32> to vector<8x128xf32>
    %c1_8 = arith.constant 1 : index
    %c0_9 = arith.constant 0 : index
    %c0_10 = arith.constant 0 : index
    %9 = vector.load %arg12[%c1_8, %c0_9, %c0_10] : memref<2x8x128xf32, #tpu.memory_space<vmem>>, vector<1x8x128xf32>
    %10 = vector.shape_cast %9 : vector<1x8x128xf32> to vector<8x128xf32>
    %c0_i32_11 = arith.constant 0 : i32
    %11 = arith.index_cast %c0_i32_11 : i32 to index
    %c0_12 = arith.constant 0 : index
    %c0_13 = arith.constant 0 : index
    %12 = vector.load %arg2[%11, %c0_12, %c0_13] : memref<4x8x512xbf16, #tpu.memory_space<vmem>>, vector<1x8x512xbf16>
    %13 = vector.shape_cast %12 : vector<1x8x512xbf16> to vector<8x512xbf16>
    %14 = arith.extf %13 : vector<8x512xbf16> to vector<8x512xf32>
    %15 = arith.truncf %4 : vector<8x128xf32> to vector<8x128xbf16>
    %c0_14 = arith.constant 0 : index
    %c0_15 = arith.constant 0 : index
    %16 = vector.load %arg3[%c0_14, %c0_15] : memref<128x512xbf16, #tpu.memory_space<vmem>>, vector<128x512xbf16>
    %cst = arith.constant dense<0.000000e+00> : vector<8x512xf32>
    %17 = tpu.matmul %15, %16, %cst {dimension_numbers = #tpu.dot_dimension_numbers<[1], [0], [0], [1], [0, 0, 1, 1], [], []>} : vector<8x128xbf16>, vector<128x512xbf16>, vector<8x512xf32> -> vector<8x512xf32>
    %18 = arith.addf %14, %17 : vector<8x512xf32>
    %19 = vector.extract_strided_slice %18 {offsets = [0, 0], sizes = [8, 128], strides = [1, 1]} : vector<8x512xf32> to vector<8x128xf32>
    %20 = arith.negf %19 : vector<8x128xf32>
    %21 = math.exp %20 : vector<8x128xf32>
    %cst_16 = arith.constant 1.000000e+00 : f32
    %22 = vector.broadcast %cst_16 : f32 to vector<8x128xf32>
    %23 = arith.addf %22, %21 : vector<8x128xf32>
    %24 = arith.divf %22, %23 : vector<8x128xf32>
    %25 = vector.extract_strided_slice %18 {offsets = [0, 128], sizes = [8, 128], strides = [1, 1]} : vector<8x512xf32> to vector<8x128xf32>
    %26 = arith.negf %25 : vector<8x128xf32>
    %27 = math.exp %26 : vector<8x128xf32>
    %cst_17 = arith.constant 1.000000e+00 : f32
    %28 = vector.broadcast %cst_17 : f32 to vector<8x128xf32>
    %29 = arith.addf %28, %27 : vector<8x128xf32>
    %30 = arith.divf %28, %29 : vector<8x128xf32>
    %31 = vector.extract_strided_slice %18 {offsets = [0, 256], sizes = [8, 128], strides = [1, 1]} : vector<8x512xf32> to vector<8x128xf32>
    %32 = math.tanh %31 : vector<8x128xf32>
    %33 = vector.extract_strided_slice %18 {offsets = [0, 384], sizes = [8, 128], strides = [1, 1]} : vector<8x512xf32> to vector<8x128xf32>
    %34 = arith.negf %33 : vector<8x128xf32>
    %35 = math.exp %34 : vector<8x128xf32>
    %cst_18 = arith.constant 1.000000e+00 : f32
    %36 = vector.broadcast %cst_18 : f32 to vector<8x128xf32>
    %37 = arith.addf %36, %35 : vector<8x128xf32>
    %38 = arith.divf %36, %37 : vector<8x128xf32>
    %39 = arith.mulf %30, %8 : vector<8x128xf32>
    %40 = arith.mulf %24, %32 : vector<8x128xf32>
    %41 = arith.addf %39, %40 : vector<8x128xf32>
    %42 = math.tanh %41 : vector<8x128xf32>
    %43 = arith.mulf %38, %42 : vector<8x128xf32>
    %44 = tpu.concatenate %43, %6 in 1 : vector<8x128xf32>, vector<8x128xf32> -> vector<8x256xf32>
    %45 = arith.truncf %44 : vector<8x256xf32> to vector<8x256xbf16>
    %c0_19 = arith.constant 0 : index
    %c0_20 = arith.constant 0 : index
    %c0_21 = arith.constant 0 : index
    %46 = vector.load %arg4[%c0_19, %c0_20, %c0_21] : memref<1x256x512xbf16, #tpu.memory_space<vmem>>, vector<1x256x512xbf16>
    %47 = vector.shape_cast %46 : vector<1x256x512xbf16> to vector<256x512xbf16>
    %cst_22 = arith.constant dense<0.000000e+00> : vector<8x512xf32>
    %48 = tpu.matmul %45, %47, %cst_22 {dimension_numbers = #tpu.dot_dimension_numbers<[1], [0], [0], [1], [0, 0, 1, 1], [], []>} : vector<8x256xbf16>, vector<256x512xbf16>, vector<8x512xf32> -> vector<8x512xf32>
    %c0_23 = arith.constant 0 : index
    %c0_24 = arith.constant 0 : index
    %c0_25 = arith.constant 0 : index
    %49 = vector.load %arg5[%c0_23, %c0_24, %c0_25] : memref<1x1x512xf32, #tpu.memory_space<vmem>>, vector<1x1x512xf32>
    %50 = vector.shape_cast %49 : vector<1x1x512xf32> to vector<1x512xf32>
    %51 = vector.broadcast %50 : vector<1x512xf32> to vector<8x512xf32>
    %52 = arith.addf %48, %51 : vector<8x512xf32>
    %53 = vector.extract_strided_slice %52 {offsets = [0, 0], sizes = [8, 128], strides = [1, 1]} : vector<8x512xf32> to vector<8x128xf32>
    %54 = arith.negf %53 : vector<8x128xf32>
    %55 = math.exp %54 : vector<8x128xf32>
    %cst_26 = arith.constant 1.000000e+00 : f32
    %56 = vector.broadcast %cst_26 : f32 to vector<8x128xf32>
    %57 = arith.addf %56, %55 : vector<8x128xf32>
    %58 = arith.divf %56, %57 : vector<8x128xf32>
    %59 = vector.extract_strided_slice %52 {offsets = [0, 128], sizes = [8, 128], strides = [1, 1]} : vector<8x512xf32> to vector<8x128xf32>
    %60 = arith.negf %59 : vector<8x128xf32>
    %61 = math.exp %60 : vector<8x128xf32>
    %cst_27 = arith.constant 1.000000e+00 : f32
    %62 = vector.broadcast %cst_27 : f32 to vector<8x128xf32>
    %63 = arith.addf %62, %61 : vector<8x128xf32>
    %64 = arith.divf %62, %63 : vector<8x128xf32>
    %65 = vector.extract_strided_slice %52 {offsets = [0, 256], sizes = [8, 128], strides = [1, 1]} : vector<8x512xf32> to vector<8x128xf32>
    %66 = math.tanh %65 : vector<8x128xf32>
    %67 = vector.extract_strided_slice %52 {offsets = [0, 384], sizes = [8, 128], strides = [1, 1]} : vector<8x512xf32> to vector<8x128xf32>
    %68 = arith.negf %67 : vector<8x128xf32>
    %69 = math.exp %68 : vector<8x128xf32>
    %cst_28 = arith.constant 1.000000e+00 : f32
    %70 = vector.broadcast %cst_28 : f32 to vector<8x128xf32>
    %71 = arith.addf %70, %69 : vector<8x128xf32>
    %72 = arith.divf %70, %71 : vector<8x128xf32>
    %73 = arith.mulf %64, %10 : vector<8x128xf32>
    %74 = arith.mulf %58, %66 : vector<8x128xf32>
    %75 = arith.addf %73, %74 : vector<8x128xf32>
    %76 = math.tanh %75 : vector<8x128xf32>
    %77 = arith.mulf %72, %76 : vector<8x128xf32>
    %c1_i32 = arith.constant 1 : i32
    %78 = arith.index_cast %c1_i32 : i32 to index
    %c0_29 = arith.constant 0 : index
    %c0_30 = arith.constant 0 : index
    %79 = vector.load %arg2[%78, %c0_29, %c0_30] : memref<4x8x512xbf16, #tpu.memory_space<vmem>>, vector<1x8x512xbf16>
    %80 = vector.shape_cast %79 : vector<1x8x512xbf16> to vector<8x512xbf16>
    %81 = arith.extf %80 : vector<8x512xbf16> to vector<8x512xf32>
    %82 = arith.truncf %43 : vector<8x128xf32> to vector<8x128xbf16>
    %c0_31 = arith.constant 0 : index
    %c0_32 = arith.constant 0 : index
    %83 = vector.load %arg3[%c0_31, %c0_32] : memref<128x512xbf16, #tpu.memory_space<vmem>>, vector<128x512xbf16>
    %cst_33 = arith.constant dense<0.000000e+00> : vector<8x512xf32>
    %84 = tpu.matmul %82, %83, %cst_33 {dimension_numbers = #tpu.dot_dimension_numbers<[1], [0], [0], [1], [0, 0, 1, 1], [], []>} : vector<8x128xbf16>, vector<128x512xbf16>, vector<8x512xf32> -> vector<8x512xf32>
    %85 = arith.addf %81, %84 : vector<8x512xf32>
    %86 = vector.extract_strided_slice %85 {offsets = [0, 0], sizes = [8, 128], strides = [1, 1]} : vector<8x512xf32> to vector<8x128xf32>
    %87 = arith.negf %86 : vector<8x128xf32>
    %88 = math.exp %87 : vector<8x128xf32>
    %cst_34 = arith.constant 1.000000e+00 : f32
    %89 = vector.broadcast %cst_34 : f32 to vector<8x128xf32>
    %90 = arith.addf %89, %88 : vector<8x128xf32>
    %91 = arith.divf %89, %90 : vector<8x128xf32>
    %92 = vector.extract_strided_slice %85 {offsets = [0, 128], sizes = [8, 128], strides = [1, 1]} : vector<8x512xf32> to vector<8x128xf32>
    %93 = arith.negf %92 : vector<8x128xf32>
    %94 = math.exp %93 : vector<8x128xf32>
    %cst_35 = arith.constant 1.000000e+00 : f32
    %95 = vector.broadcast %cst_35 : f32 to vector<8x128xf32>
    %96 = arith.addf %95, %94 : vector<8x128xf32>
    %97 = arith.divf %95, %96 : vector<8x128xf32>
    %98 = vector.extract_strided_slice %85 {offsets = [0, 256], sizes = [8, 128], strides = [1, 1]} : vector<8x512xf32> to vector<8x128xf32>
    %99 = math.tanh %98 : vector<8x128xf32>
    %100 = vector.extract_strided_slice %85 {offsets = [0, 384], sizes = [8, 128], strides = [1, 1]} : vector<8x512xf32> to vector<8x128xf32>
    %101 = arith.negf %100 : vector<8x128xf32>
    %102 = math.exp %101 : vector<8x128xf32>
    %cst_36 = arith.constant 1.000000e+00 : f32
    %103 = vector.broadcast %cst_36 : f32 to vector<8x128xf32>
    %104 = arith.addf %103, %102 : vector<8x128xf32>
    %105 = arith.divf %103, %104 : vector<8x128xf32>
    %106 = arith.mulf %97, %41 : vector<8x128xf32>
    %107 = arith.mulf %91, %99 : vector<8x128xf32>
    %108 = arith.addf %106, %107 : vector<8x128xf32>
    %109 = math.tanh %108 : vector<8x128xf32>
    %110 = arith.mulf %105, %109 : vector<8x128xf32>
    %111 = tpu.concatenate %110, %77 in 1 : vector<8x128xf32>, vector<8x128xf32> -> vector<8x256xf32>
    %112 = arith.truncf %111 : vector<8x256xf32> to vector<8x256xbf16>
    %c0_37 = arith.constant 0 : index
    %c0_38 = arith.constant 0 : index
    %c0_39 = arith.constant 0 : index
    %113 = vector.load %arg4[%c0_37, %c0_38, %c0_39] : memref<1x256x512xbf16, #tpu.memory_space<vmem>>, vector<1x256x512xbf16>
    %114 = vector.shape_cast %113 : vector<1x256x512xbf16> to vector<256x512xbf16>
    %cst_40 = arith.constant dense<0.000000e+00> : vector<8x512xf32>
    %115 = tpu.matmul %112, %114, %cst_40 {dimension_numbers = #tpu.dot_dimension_numbers<[1], [0], [0], [1], [0, 0, 1, 1], [], []>} : vector<8x256xbf16>, vector<256x512xbf16>, vector<8x512xf32> -> vector<8x512xf32>
    %c0_41 = arith.constant 0 : index
    %c0_42 = arith.constant 0 : index
    %c0_43 = arith.constant 0 : index
    %116 = vector.load %arg5[%c0_41, %c0_42, %c0_43] : memref<1x1x512xf32, #tpu.memory_space<vmem>>, vector<1x1x512xf32>
    %117 = vector.shape_cast %116 : vector<1x1x512xf32> to vector<1x512xf32>
    %118 = vector.broadcast %117 : vector<1x512xf32> to vector<8x512xf32>
    %119 = arith.addf %115, %118 : vector<8x512xf32>
    %120 = vector.extract_strided_slice %119 {offsets = [0, 0], sizes = [8, 128], strides = [1, 1]} : vector<8x512xf32> to vector<8x128xf32>
    %121 = arith.negf %120 : vector<8x128xf32>
    %122 = math.exp %121 : vector<8x128xf32>
    %cst_44 = arith.constant 1.000000e+00 : f32
    %123 = vector.broadcast %cst_44 : f32 to vector<8x128xf32>
    %124 = arith.addf %123, %122 : vector<8x128xf32>
    %125 = arith.divf %123, %124 : vector<8x128xf32>
    %126 = vector.extract_strided_slice %119 {offsets = [0, 128], sizes = [8, 128], strides = [1, 1]} : vector<8x512xf32> to vector<8x128xf32>
    %127 = arith.negf %126 : vector<8x128xf32>
    %128 = math.exp %127 : vector<8x128xf32>
    %cst_45 = arith.constant 1.000000e+00 : f32
    %129 = vector.broadcast %cst_45 : f32 to vector<8x128xf32>
    %130 = arith.addf %129, %128 : vector<8x128xf32>
    %131 = arith.divf %129, %130 : vector<8x128xf32>
    %132 = vector.extract_strided_slice %119 {offsets = [0, 256], sizes = [8, 128], strides = [1, 1]} : vector<8x512xf32> to vector<8x128xf32>
    %133 = math.tanh %132 : vector<8x128xf32>
    %134 = vector.extract_strided_slice %119 {offsets = [0, 384], sizes = [8, 128], strides = [1, 1]} : vector<8x512xf32> to vector<8x128xf32>
    %135 = arith.negf %134 : vector<8x128xf32>
    %136 = math.exp %135 : vector<8x128xf32>
    %cst_46 = arith.constant 1.000000e+00 : f32
    %137 = vector.broadcast %cst_46 : f32 to vector<8x128xf32>
    %138 = arith.addf %137, %136 : vector<8x128xf32>
    %139 = arith.divf %137, %138 : vector<8x128xf32>
    %140 = arith.mulf %131, %75 : vector<8x128xf32>
    %141 = arith.mulf %125, %133 : vector<8x128xf32>
    %142 = arith.addf %140, %141 : vector<8x128xf32>
    %143 = math.tanh %142 : vector<8x128xf32>
    %144 = arith.mulf %139, %143 : vector<8x128xf32>
    %c2_i32 = arith.constant 2 : i32
    %145 = arith.index_cast %c2_i32 : i32 to index
    %c0_47 = arith.constant 0 : index
    %c0_48 = arith.constant 0 : index
    %146 = vector.load %arg2[%145, %c0_47, %c0_48] : memref<4x8x512xbf16, #tpu.memory_space<vmem>>, vector<1x8x512xbf16>
    %147 = vector.shape_cast %146 : vector<1x8x512xbf16> to vector<8x512xbf16>
    %148 = arith.extf %147 : vector<8x512xbf16> to vector<8x512xf32>
    %149 = arith.truncf %110 : vector<8x128xf32> to vector<8x128xbf16>
    %c0_49 = arith.constant 0 : index
    %c0_50 = arith.constant 0 : index
    %150 = vector.load %arg3[%c0_49, %c0_50] : memref<128x512xbf16, #tpu.memory_space<vmem>>, vector<128x512xbf16>
    %cst_51 = arith.constant dense<0.000000e+00> : vector<8x512xf32>
    %151 = tpu.matmul %149, %150, %cst_51 {dimension_numbers = #tpu.dot_dimension_numbers<[1], [0], [0], [1], [0, 0, 1, 1], [], []>} : vector<8x128xbf16>, vector<128x512xbf16>, vector<8x512xf32> -> vector<8x512xf32>
    %152 = arith.addf %148, %151 : vector<8x512xf32>
    %153 = vector.extract_strided_slice %152 {offsets = [0, 0], sizes = [8, 128], strides = [1, 1]} : vector<8x512xf32> to vector<8x128xf32>
    %154 = arith.negf %153 : vector<8x128xf32>
    %155 = math.exp %154 : vector<8x128xf32>
    %cst_52 = arith.constant 1.000000e+00 : f32
    %156 = vector.broadcast %cst_52 : f32 to vector<8x128xf32>
    %157 = arith.addf %156, %155 : vector<8x128xf32>
    %158 = arith.divf %156, %157 : vector<8x128xf32>
    %159 = vector.extract_strided_slice %152 {offsets = [0, 128], sizes = [8, 128], strides = [1, 1]} : vector<8x512xf32> to vector<8x128xf32>
    %160 = arith.negf %159 : vector<8x128xf32>
    %161 = math.exp %160 : vector<8x128xf32>
    %cst_53 = arith.constant 1.000000e+00 : f32
    %162 = vector.broadcast %cst_53 : f32 to vector<8x128xf32>
    %163 = arith.addf %162, %161 : vector<8x128xf32>
    %164 = arith.divf %162, %163 : vector<8x128xf32>
    %165 = vector.extract_strided_slice %152 {offsets = [0, 256], sizes = [8, 128], strides = [1, 1]} : vector<8x512xf32> to vector<8x128xf32>
    %166 = math.tanh %165 : vector<8x128xf32>
    %167 = vector.extract_strided_slice %152 {offsets = [0, 384], sizes = [8, 128], strides = [1, 1]} : vector<8x512xf32> to vector<8x128xf32>
    %168 = arith.negf %167 : vector<8x128xf32>
    %169 = math.exp %168 : vector<8x128xf32>
    %cst_54 = arith.constant 1.000000e+00 : f32
    %170 = vector.broadcast %cst_54 : f32 to vector<8x128xf32>
    %171 = arith.addf %170, %169 : vector<8x128xf32>
    %172 = arith.divf %170, %171 : vector<8x128xf32>
    %173 = arith.mulf %164, %108 : vector<8x128xf32>
    %174 = arith.mulf %158, %166 : vector<8x128xf32>
    %175 = arith.addf %173, %174 : vector<8x128xf32>
    %176 = math.tanh %175 : vector<8x128xf32>
    %177 = arith.mulf %172, %176 : vector<8x128xf32>
    %178 = tpu.concatenate %177, %144 in 1 : vector<8x128xf32>, vector<8x128xf32> -> vector<8x256xf32>
    %179 = arith.truncf %178 : vector<8x256xf32> to vector<8x256xbf16>
    %c0_55 = arith.constant 0 : index
    %c0_56 = arith.constant 0 : index
    %c0_57 = arith.constant 0 : index
    %180 = vector.load %arg4[%c0_55, %c0_56, %c0_57] : memref<1x256x512xbf16, #tpu.memory_space<vmem>>, vector<1x256x512xbf16>
    %181 = vector.shape_cast %180 : vector<1x256x512xbf16> to vector<256x512xbf16>
    %cst_58 = arith.constant dense<0.000000e+00> : vector<8x512xf32>
    %182 = tpu.matmul %179, %181, %cst_58 {dimension_numbers = #tpu.dot_dimension_numbers<[1], [0], [0], [1], [0, 0, 1, 1], [], []>} : vector<8x256xbf16>, vector<256x512xbf16>, vector<8x512xf32> -> vector<8x512xf32>
    %c0_59 = arith.constant 0 : index
    %c0_60 = arith.constant 0 : index
    %c0_61 = arith.constant 0 : index
    %183 = vector.load %arg5[%c0_59, %c0_60, %c0_61] : memref<1x1x512xf32, #tpu.memory_space<vmem>>, vector<1x1x512xf32>
    %184 = vector.shape_cast %183 : vector<1x1x512xf32> to vector<1x512xf32>
    %185 = vector.broadcast %184 : vector<1x512xf32> to vector<8x512xf32>
    %186 = arith.addf %182, %185 : vector<8x512xf32>
    %187 = vector.extract_strided_slice %186 {offsets = [0, 0], sizes = [8, 128], strides = [1, 1]} : vector<8x512xf32> to vector<8x128xf32>
    %188 = arith.negf %187 : vector<8x128xf32>
    %189 = math.exp %188 : vector<8x128xf32>
    %cst_62 = arith.constant 1.000000e+00 : f32
    %190 = vector.broadcast %cst_62 : f32 to vector<8x128xf32>
    %191 = arith.addf %190, %189 : vector<8x128xf32>
    %192 = arith.divf %190, %191 : vector<8x128xf32>
    %193 = vector.extract_strided_slice %186 {offsets = [0, 128], sizes = [8, 128], strides = [1, 1]} : vector<8x512xf32> to vector<8x128xf32>
    %194 = arith.negf %193 : vector<8x128xf32>
    %195 = math.exp %194 : vector<8x128xf32>
    %cst_63 = arith.constant 1.000000e+00 : f32
    %196 = vector.broadcast %cst_63 : f32 to vector<8x128xf32>
    %197 = arith.addf %196, %195 : vector<8x128xf32>
    %198 = arith.divf %196, %197 : vector<8x128xf32>
    %199 = vector.extract_strided_slice %186 {offsets = [0, 256], sizes = [8, 128], strides = [1, 1]} : vector<8x512xf32> to vector<8x128xf32>
    %200 = math.tanh %199 : vector<8x128xf32>
    %201 = vector.extract_strided_slice %186 {offsets = [0, 384], sizes = [8, 128], strides = [1, 1]} : vector<8x512xf32> to vector<8x128xf32>
    %202 = arith.negf %201 : vector<8x128xf32>
    %203 = math.exp %202 : vector<8x128xf32>
    %cst_64 = arith.constant 1.000000e+00 : f32
    %204 = vector.broadcast %cst_64 : f32 to vector<8x128xf32>
    %205 = arith.addf %204, %203 : vector<8x128xf32>
    %206 = arith.divf %204, %205 : vector<8x128xf32>
    %207 = arith.mulf %198, %142 : vector<8x128xf32>
    %208 = arith.mulf %192, %200 : vector<8x128xf32>
    %209 = arith.addf %207, %208 : vector<8x128xf32>
    %210 = math.tanh %209 : vector<8x128xf32>
    %211 = arith.mulf %206, %210 : vector<8x128xf32>
    %c3_i32 = arith.constant 3 : i32
    %212 = arith.index_cast %c3_i32 : i32 to index
    %c0_65 = arith.constant 0 : index
    %c0_66 = arith.constant 0 : index
    %213 = vector.load %arg2[%212, %c0_65, %c0_66] : memref<4x8x512xbf16, #tpu.memory_space<vmem>>, vector<1x8x512xbf16>
    %214 = vector.shape_cast %213 : vector<1x8x512xbf16> to vector<8x512xbf16>
    %215 = arith.extf %214 : vector<8x512xbf16> to vector<8x512xf32>
    %216 = arith.truncf %177 : vector<8x128xf32> to vector<8x128xbf16>
    %c0_67 = arith.constant 0 : index
    %c0_68 = arith.constant 0 : index
    %217 = vector.load %arg3[%c0_67, %c0_68] : memref<128x512xbf16, #tpu.memory_space<vmem>>, vector<128x512xbf16>
    %cst_69 = arith.constant dense<0.000000e+00> : vector<8x512xf32>
    %218 = tpu.matmul %216, %217, %cst_69 {dimension_numbers = #tpu.dot_dimension_numbers<[1], [0], [0], [1], [0, 0, 1, 1], [], []>} : vector<8x128xbf16>, vector<128x512xbf16>, vector<8x512xf32> -> vector<8x512xf32>
    %219 = arith.addf %215, %218 : vector<8x512xf32>
    %220 = vector.extract_strided_slice %219 {offsets = [0, 0], sizes = [8, 128], strides = [1, 1]} : vector<8x512xf32> to vector<8x128xf32>
    %221 = arith.negf %220 : vector<8x128xf32>
    %222 = math.exp %221 : vector<8x128xf32>
    %cst_70 = arith.constant 1.000000e+00 : f32
    %223 = vector.broadcast %cst_70 : f32 to vector<8x128xf32>
    %224 = arith.addf %223, %222 : vector<8x128xf32>
    %225 = arith.divf %223, %224 : vector<8x128xf32>
    %226 = vector.extract_strided_slice %219 {offsets = [0, 128], sizes = [8, 128], strides = [1, 1]} : vector<8x512xf32> to vector<8x128xf32>
    %227 = arith.negf %226 : vector<8x128xf32>
    %228 = math.exp %227 : vector<8x128xf32>
    %cst_71 = arith.constant 1.000000e+00 : f32
    %229 = vector.broadcast %cst_71 : f32 to vector<8x128xf32>
    %230 = arith.addf %229, %228 : vector<8x128xf32>
    %231 = arith.divf %229, %230 : vector<8x128xf32>
    %232 = vector.extract_strided_slice %219 {offsets = [0, 256], sizes = [8, 128], strides = [1, 1]} : vector<8x512xf32> to vector<8x128xf32>
    %233 = math.tanh %232 : vector<8x128xf32>
    %234 = vector.extract_strided_slice %219 {offsets = [0, 384], sizes = [8, 128], strides = [1, 1]} : vector<8x512xf32> to vector<8x128xf32>
    %235 = arith.negf %234 : vector<8x128xf32>
    %236 = math.exp %235 : vector<8x128xf32>
    %cst_72 = arith.constant 1.000000e+00 : f32
    %237 = vector.broadcast %cst_72 : f32 to vector<8x128xf32>
    %238 = arith.addf %237, %236 : vector<8x128xf32>
    %239 = arith.divf %237, %238 : vector<8x128xf32>
    %240 = arith.mulf %231, %175 : vector<8x128xf32>
    %241 = arith.mulf %225, %233 : vector<8x128xf32>
    %242 = arith.addf %240, %241 : vector<8x128xf32>
    %243 = math.tanh %242 : vector<8x128xf32>
    %244 = arith.mulf %239, %243 : vector<8x128xf32>
    %245 = tpu.concatenate %244, %211 in 1 : vector<8x128xf32>, vector<8x128xf32> -> vector<8x256xf32>
    %246 = arith.truncf %245 : vector<8x256xf32> to vector<8x256xbf16>
    %c0_73 = arith.constant 0 : index
    %c0_74 = arith.constant 0 : index
    %c0_75 = arith.constant 0 : index
    %247 = vector.load %arg4[%c0_73, %c0_74, %c0_75] : memref<1x256x512xbf16, #tpu.memory_space<vmem>>, vector<1x256x512xbf16>
    %248 = vector.shape_cast %247 : vector<1x256x512xbf16> to vector<256x512xbf16>
    %cst_76 = arith.constant dense<0.000000e+00> : vector<8x512xf32>
    %249 = tpu.matmul %246, %248, %cst_76 {dimension_numbers = #tpu.dot_dimension_numbers<[1], [0], [0], [1], [0, 0, 1, 1], [], []>} : vector<8x256xbf16>, vector<256x512xbf16>, vector<8x512xf32> -> vector<8x512xf32>
    %c0_77 = arith.constant 0 : index
    %c0_78 = arith.constant 0 : index
    %c0_79 = arith.constant 0 : index
    %250 = vector.load %arg5[%c0_77, %c0_78, %c0_79] : memref<1x1x512xf32, #tpu.memory_space<vmem>>, vector<1x1x512xf32>
    %251 = vector.shape_cast %250 : vector<1x1x512xf32> to vector<1x512xf32>
    %252 = vector.broadcast %251 : vector<1x512xf32> to vector<8x512xf32>
    %253 = arith.addf %249, %252 : vector<8x512xf32>
    %254 = vector.extract_strided_slice %253 {offsets = [0, 0], sizes = [8, 128], strides = [1, 1]} : vector<8x512xf32> to vector<8x128xf32>
    %255 = arith.negf %254 : vector<8x128xf32>
    %256 = math.exp %255 : vector<8x128xf32>
    %cst_80 = arith.constant 1.000000e+00 : f32
    %257 = vector.broadcast %cst_80 : f32 to vector<8x128xf32>
    %258 = arith.addf %257, %256 : vector<8x128xf32>
    %259 = arith.divf %257, %258 : vector<8x128xf32>
    %260 = vector.extract_strided_slice %253 {offsets = [0, 128], sizes = [8, 128], strides = [1, 1]} : vector<8x512xf32> to vector<8x128xf32>
    %261 = arith.negf %260 : vector<8x128xf32>
    %262 = math.exp %261 : vector<8x128xf32>
    %cst_81 = arith.constant 1.000000e+00 : f32
    %263 = vector.broadcast %cst_81 : f32 to vector<8x128xf32>
    %264 = arith.addf %263, %262 : vector<8x128xf32>
    %265 = arith.divf %263, %264 : vector<8x128xf32>
    %266 = vector.extract_strided_slice %253 {offsets = [0, 256], sizes = [8, 128], strides = [1, 1]} : vector<8x512xf32> to vector<8x128xf32>
    %267 = math.tanh %266 : vector<8x128xf32>
    %268 = vector.extract_strided_slice %253 {offsets = [0, 384], sizes = [8, 128], strides = [1, 1]} : vector<8x512xf32> to vector<8x128xf32>
    %269 = arith.negf %268 : vector<8x128xf32>
    %270 = math.exp %269 : vector<8x128xf32>
    %cst_82 = arith.constant 1.000000e+00 : f32
    %271 = vector.broadcast %cst_82 : f32 to vector<8x128xf32>
    %272 = arith.addf %271, %270 : vector<8x128xf32>
    %273 = arith.divf %271, %272 : vector<8x128xf32>
    %274 = arith.mulf %265, %209 : vector<8x128xf32>
    %275 = arith.mulf %259, %267 : vector<8x128xf32>
    %276 = arith.addf %274, %275 : vector<8x128xf32>
    %277 = math.tanh %276 : vector<8x128xf32>
    %278 = arith.mulf %273, %277 : vector<8x128xf32>
    %c4_i32 = arith.constant 4 : i32
    %c0_83 = arith.constant 0 : index
    %c0_84 = arith.constant 0 : index
    %c0_85 = arith.constant 0 : index
    %279 = vector.load %arg11[%c0_83, %c0_84, %c0_85] : memref<2x8x128xf32, #tpu.memory_space<vmem>>, vector<1x8x128xf32>
    %280 = vector.shape_cast %279 : vector<1x8x128xf32> to vector<8x128xf32>
    %281 = vector.shape_cast %244 : vector<8x128xf32> to vector<1x8x128xf32>
    tpu.vector_store %arg11[%c0_83, %c0_84, %c0_85], %281 {strides = array<i32>} : memref<2x8x128xf32, #tpu.memory_space<vmem>>, vector<1x8x128xf32>,
    %c0_86 = arith.constant 0 : index
    %c0_87 = arith.constant 0 : index
    %c0_88 = arith.constant 0 : index
    %282 = vector.load %arg12[%c0_86, %c0_87, %c0_88] : memref<2x8x128xf32, #tpu.memory_space<vmem>>, vector<1x8x128xf32>
    %283 = vector.shape_cast %282 : vector<1x8x128xf32> to vector<8x128xf32>
    %284 = vector.shape_cast %242 : vector<8x128xf32> to vector<1x8x128xf32>
    tpu.vector_store %arg12[%c0_86, %c0_87, %c0_88], %284 {strides = array<i32>} : memref<2x8x128xf32, #tpu.memory_space<vmem>>, vector<1x8x128xf32>,
    %c1_89 = arith.constant 1 : index
    %c0_90 = arith.constant 0 : index
    %c0_91 = arith.constant 0 : index
    %285 = vector.load %arg11[%c1_89, %c0_90, %c0_91] : memref<2x8x128xf32, #tpu.memory_space<vmem>>, vector<1x8x128xf32>
    %286 = vector.shape_cast %285 : vector<1x8x128xf32> to vector<8x128xf32>
    %287 = vector.shape_cast %278 : vector<8x128xf32> to vector<1x8x128xf32>
    tpu.vector_store %arg11[%c1_89, %c0_90, %c0_91], %287 {strides = array<i32>} : memref<2x8x128xf32, #tpu.memory_space<vmem>>, vector<1x8x128xf32>,
    %c1_92 = arith.constant 1 : index
    %c0_93 = arith.constant 0 : index
    %c0_94 = arith.constant 0 : index
    %288 = vector.load %arg12[%c1_92, %c0_93, %c0_94] : memref<2x8x128xf32, #tpu.memory_space<vmem>>, vector<1x8x128xf32>
    %289 = vector.shape_cast %288 : vector<1x8x128xf32> to vector<8x128xf32>
    %290 = vector.shape_cast %276 : vector<8x128xf32> to vector<1x8x128xf32>
    tpu.vector_store %arg12[%c1_92, %c0_93, %c0_94], %290 {strides = array<i32>} : memref<2x8x128xf32, #tpu.memory_space<vmem>>, vector<1x8x128xf32>,
    %c1_i32_95 = arith.constant 1 : i32
    %291 = arith.cmpi eq, %arg1, %c1_i32_95 : i32
    %292 = arith.extui %291 : i1 to i32
    %c0_i32_96 = arith.constant 0 : i32
    %293 = arith.cmpi ne, %292, %c0_i32_96 : i32
    scf.if %293 {
      %294 = arith.truncf %278 : vector<8x128xf32> to vector<8x128xbf16>
      %c0_97 = arith.constant 0 : index
      %c0_98 = arith.constant 0 : index
      %295 = vector.load %arg8[%c0_97, %c0_98] : memref<128x3xbf16, #tpu.memory_space<vmem>>, vector<128x3xbf16>
      %cst_99 = arith.constant dense<0.000000e+00> : vector<8x3xf32>
      %296 = tpu.matmul %294, %295, %cst_99 {dimension_numbers = #tpu.dot_dimension_numbers<[1], [0], [0], [1], [0, 0, 1, 1], [], []>} : vector<8x128xbf16>, vector<128x3xbf16>, vector<8x3xf32> -> vector<8x3xf32>
      %c0_100 = arith.constant 0 : index
      %c0_101 = arith.constant 0 : index
      %297 = vector.load %arg9[%c0_100, %c0_101] : memref<1x3xf32, #tpu.memory_space<vmem>>, vector<1x3xf32>
      %298 = vector.broadcast %297 : vector<1x3xf32> to vector<8x3xf32>
      %299 = arith.addf %296, %298 : vector<8x3xf32>
      %c0_102 = arith.constant 0 : index
      %c0_103 = arith.constant 0 : index
      %300 = vector.load %arg10[%c0_102, %c0_103] : memref<8x3xf32, #tpu.memory_space<vmem>>, vector<8x3xf32>
      tpu.vector_store %arg10[%c0_102, %c0_103], %299 {strides = array<i32>} : memref<8x3xf32, #tpu.memory_space<vmem>>, vector<8x3xf32>,
    } else {
    }
    return
  }
  func.func @transform_0(%arg0: i32, %arg1: i32) -> (i32, i32, i32) {
    %c0_i32 = arith.constant 0 : i32
    %c0_i32_0 = arith.constant 0 : i32
    return %arg1, %arg0, %c0_i32 : i32, i32, i32
  }
  func.func @transform_1(%arg0: i32, %arg1: i32) -> (i32, i32) {
    %c0_i32 = arith.constant 0 : i32
    %c0_i32_0 = arith.constant 0 : i32
    %c0_i32_1 = arith.constant 0 : i32
    return %c0_i32, %c0_i32_0 : i32, i32
  }
  func.func @transform_2(%arg0: i32, %arg1: i32) -> (i32, i32, i32) {
    %c0_i32 = arith.constant 0 : i32
    %c0_i32_0 = arith.constant 0 : i32
    %c0_i32_1 = arith.constant 0 : i32
    %c0_i32_2 = arith.constant 0 : i32
    return %c0_i32, %c0_i32_0, %c0_i32_1 : i32, i32, i32
  }
  func.func @transform_3(%arg0: i32, %arg1: i32) -> (i32, i32, i32) {
    %c0_i32 = arith.constant 0 : i32
    %c0_i32_0 = arith.constant 0 : i32
    %c0_i32_1 = arith.constant 0 : i32
    %c0_i32_2 = arith.constant 0 : i32
    return %c0_i32, %c0_i32_0, %c0_i32_1 : i32, i32, i32
  }
  func.func @transform_4(%arg0: i32, %arg1: i32) -> (i32, i32, i32) {
    %c0_i32 = arith.constant 0 : i32
    %c0_i32_0 = arith.constant 0 : i32
    %c0_i32_1 = arith.constant 0 : i32
    return %c0_i32, %arg0, %c0_i32_0 : i32, i32, i32
  }
  func.func @transform_5(%arg0: i32, %arg1: i32) -> (i32, i32, i32) {
    %c0_i32 = arith.constant 0 : i32
    %c0_i32_0 = arith.constant 0 : i32
    %c0_i32_1 = arith.constant 0 : i32
    return %c0_i32, %arg0, %c0_i32_0 : i32, i32, i32
  }
  func.func @transform_6(%arg0: i32, %arg1: i32) -> (i32, i32) {
    %c0_i32 = arith.constant 0 : i32
    %c0_i32_0 = arith.constant 0 : i32
    %c0_i32_1 = arith.constant 0 : i32
    return %c0_i32, %c0_i32_0 : i32, i32
  }
  func.func @transform_7(%arg0: i32, %arg1: i32) -> (i32, i32) {
    %c0_i32 = arith.constant 0 : i32
    %c0_i32_0 = arith.constant 0 : i32
    %c0_i32_1 = arith.constant 0 : i32
    return %c0_i32, %c0_i32_0 : i32, i32
  }
  func.func @transform_8(%arg0: i32, %arg1: i32) -> (i32, i32) {
    %c0_i32 = arith.constant 0 : i32
    %c0_i32_0 = arith.constant 0 : i32
    return %arg0, %c0_i32 : i32, i32
  }
}

</mosaic_0001>

<llo_original>
// kernel: lstm_forward.1
$region0: #{lstm_forward.1}
  #allocation0 [shape = 'u32[]', space=smem, size = 0x4, offset = 0x4, fixed_abs, tag = 'smem constant byte address 0x4 - core index']
  #allocation1 [shape = 'u32[144,128]{1,0:T(1,128)}', space=vmem, size = 0x12000, scoped, tag = 'internal scratch']
  #allocation2 [shape = 'f32[2,8,128]{2,1,0:T(8,128)}', space=vmem, size = 0x2000, scoped, tag = 'scratch operand']
  #allocation3 [shape = 'f32[2,8,128]{2,1,0:T(8,128)}', space=vmem, size = 0x2000, scoped, tag = 'scratch operand']
  %s0 = inlined_call_operand.vmem [shape: bf16[8,8,512], index: 0, kind: input, shape index: {}]
  %s1 = inlined_call_operand.vmem [shape: bf16[128,512], index: 1, kind: input, shape index: {}]
  %s2 = inlined_call_operand.hbm [shape: bf16[1,256,512], index: 2, kind: input, shape index: {}]
  %s3 = inlined_call_operand.vmem [shape: f32[1,1,512], index: 3, kind: input, shape index: {}]
  %s4 = inlined_call_operand.vmem [shape: f32[2,8,128], index: 4, kind: input, shape index: {}]
  %s5 = inlined_call_operand.vmem [shape: f32[2,8,128], index: 5, kind: input, shape index: {}]
  %s6 = inlined_call_operand.vmem [shape: bf16[128,3], index: 6, kind: input, shape index: {}]
  %s7 = inlined_call_operand.vmem [shape: f32[1,3], index: 7, kind: input, shape index: {}]
  %s8 = inlined_call_operand.vmem [shape: f32[8,3], index: 8, kind: output, shape index: {}]
  %s9 = sld [smem:[#allocation0]]
  $region77: #{lstm_forward.1} parent=0
    _
  %s11 = ssub.s32 1, %s9
  %s12 = scalar_select 0, %s11, %s9
  $region1: #{lstm_forward.1} parent=0
    #allocation4 [shape = 'u8[262144]{0}', space=vmem, size = 0x40000, scoped, tag = 'input window, operand 2, single buffered']
    #allocation5 [shape = 's32[2]{0}', space=sflag, size = 0x8, scoped, tag = 'scoped memory for lstm_forward.1']
    %13 = vsyncpa [#allocation5], 0
    loop: start=0, step=1, limit=4
    $region2: #{lstm_forward.1} parent=1 // loop_pre_header
      _
    $region3: #{lstm_forward.1} parent=1 // loop_header
      %s15 = sphi 0, %s19
      %p16 = scmp.ge.s32.totalorder %s15, 4
      %s22 = sphi 0, %s34
      %s23 = sphi 0, %s30
      %s24 = sphi 0, %s22
      %s25 = sphi 0, %s23
      %s26 = sphi 0, %s24
      %s27 = sphi 0, %s25
      %s39 = sphi 0, %s41
      %s42 = sphi 0, %s39
      %s43 = sphi 0, %s42
      %s59 = sphi 0, %s43
      %s63 = sphi 0, %s63
      %s65 = sphi 0, %s63
      %s66 = sphi 0, %s65
      %s80 = sphi 0, %s66
      %s84 = sphi 0, %s84
      %s86 = sphi 0, %s84
      %s87 = sphi 0, %s86
      %s101 = sphi 0, %s87
      %s105 = sphi 0, %s105
      %s107 = sphi 0, %s105
      %s108 = sphi 0, %s107
      %s122 = sphi 0, %s108
      %s128 = sphi 0, %s130
      %s131 = sphi 0, %s128
      %s132 = sphi 0, %s131
      %s148 = sphi 0, %s132
      %s154 = sphi 0, %s156
      %s157 = sphi 0, %s154
      %s158 = sphi 0, %s157
      %s174 = sphi 0, %s158
      %s178 = sphi 0, %s178
      %s180 = sphi 0, %s178
      %s181 = sphi 0, %s180
      %s195 = sphi 0, %s181
      %s199 = sphi 0, %s199
      %s201 = sphi 0, %s199
      %s202 = sphi 0, %s201
      %s216 = sphi 0, %s202
      %s222 = sphi 0, %s224
      %s225 = sphi 0, %s222
      %s226 = sphi 0, %s225
      %s242 = sphi 0, %s226
    $region4: #{lstm_forward.1} parent=1 // loop_header_branch
      %18 = sbr.rel (%p16) target = $region8
    $region5: #{lstm_forward.1} parent=1 // loop_body
      %s20 = ssub.s32 %s15, 1
      %s21 = ssub.s32 %s15, 2
      %s28 = sadd.s32 1, %s23
      %p29 = scmp.ge.s32.totalorder %s28, 2
      %s30 = scalar_select %p29, 0, %s28
      %s31 = sadd.s32 1, %s22
      %s32 = scalar_select %p29, %s31, %s22
      %p33 = scmp.ge.s32.totalorder %s32, 1
      %s34 = scalar_select %p33, 0, %s32
      %s35 = ssub.s32 %s23, %s30
      %s36 = ssub.s32 %s22, %s34
      %s37 = sor.u32 %s35, %s36
      %p38 = scmp.eq.s32.totalorder %s37, 0
      %s40 = sadd.s32 %s39, 1
      %s41 = scalar_select %p38, %s39, %s40
      %p44 = pneg %p38
      %p45 = scmp.eq.s32.totalorder %s15, 1
      %p46 = por %p44, %p45
      %p47 = scmp.ne.s32.totalorder %s39, %s42
      %p48 = scmp.eq.s32.totalorder %s15, 0
      %p49 = por %p47, %p48
      %p50 = scmp.ne.s32.totalorder %s39, %s42
      %p51 = scmp.eq.s32.totalorder %s20, 1
      %p52 = por %p50, %p51
      %p53 = scmp.ne.s32.totalorder %s42, %s43
      %p54 = scmp.eq.s32.totalorder %s20, 0
      %p55 = por %p53, %p54
      %p56 = scmp.ne.s32.totalorder %s42, %s43
      %p57 = scmp.eq.s32.totalorder %s21, 1
      %p58 = por %p56, %p57
      %p60 = scmp.ne.s32.totalorder %s43, %s59
      %p61 = scmp.eq.s32.totalorder %s21, 0
      %p62 = por %p60, %p61
      %s64 = sadd.s32 %s63, 1
      %p67 = scmp.eq.s32.totalorder %s15, 1
      %p68 = scmp.ne.s32.totalorder %s63, %s65
      %p69 = scmp.eq.s32.totalorder %s15, 0
      %p70 = por %p68, %p69
      %p71 = scmp.ne.s32.totalorder %s63, %s65
      %p72 = scmp.eq.s32.totalorder %s20, 1
      %p73 = por %p71, %p72
      %p74 = scmp.ne.s32.totalorder %s65, %s66
      %p75 = scmp.eq.s32.totalorder %s20, 0
      %p76 = por %p74, %p75
      %p77 = scmp.ne.s32.totalorder %s65, %s66
      %p78 = scmp.eq.s32.totalorder %s21, 1
      %p79 = por %p77, %p78
      %p81 = scmp.ne.s32.totalorder %s66, %s80
      %p82 = scmp.eq.s32.totalorder %s21, 0
      %p83 = por %p81, %p82
      %s85 = sadd.s32 %s84, 1
      %p88 = scmp.eq.s32.totalorder %s15, 1
      %p89 = scmp.ne.s32.totalorder %s84, %s86
      %p90 = scmp.eq.s32.totalorder %s15, 0
      %p91 = por %p89, %p90
      %p92 = scmp.ne.s32.totalorder %s84, %s86
      %p93 = scmp.eq.s32.totalorder %s20, 1
      %p94 = por %p92, %p93
      %p95 = scmp.ne.s32.totalorder %s86, %s87
      %p96 = scmp.eq.s32.totalorder %s20, 0
      %p97 = por %p95, %p96
      %p98 = scmp.ne.s32.totalorder %s86, %s87
      %p99 = scmp.eq.s32.totalorder %s21, 1
      %p100 = por %p98, %p99
      %p102 = scmp.ne.s32.totalorder %s87, %s101
      %p103 = scmp.eq.s32.totalorder %s21, 0
      %p104 = por %p102, %p103
      %s106 = sadd.s32 %s105, 1
      %p109 = scmp.eq.s32.totalorder %s15, 1
      %p110 = scmp.ne.s32.totalorder %s105, %s107
      %p111 = scmp.eq.s32.totalorder %s15, 0
      %p112 = por %p110, %p111
      %p113 = scmp.ne.s32.totalorder %s105, %s107
      %p114 = scmp.eq.s32.totalorder %s20, 1
      %p115 = por %p113, %p114
      %p116 = scmp.ne.s32.totalorder %s107, %s108
      %p117 = scmp.eq.s32.totalorder %s20, 0
      %p118 = por %p116, %p117
      %p119 = scmp.ne.s32.totalorder %s107, %s108
      %p120 = scmp.eq.s32.totalorder %s21, 1
      %p121 = por %p119, %p120
      %p123 = scmp.ne.s32.totalorder %s108, %s122
      %p124 = scmp.eq.s32.totalorder %s21, 0
      %p125 = por %p123, %p124
      %s126 = ssub.s32 %s22, %s34
      %p127 = scmp.eq.s32.totalorder %s126, 0
      %s129 = sadd.s32 %s128, 1
      %s130 = scalar_select %p127, %s128, %s129
      %p133 = pneg %p127
      %p134 = scmp.eq.s32.totalorder %s15, 1
      %p135 = por %p133, %p134
      %p136 = scmp.ne.s32.totalorder %s128, %s131
      %p137 = scmp.eq.s32.totalorder %s15, 0
      %p138 = por %p136, %p137
      %p139 = scmp.ne.s32.totalorder %s128, %s131
      %p140 = scmp.eq.s32.totalorder %s20, 1
      %p141 = por %p139, %p140
      %p142 = scmp.ne.s32.totalorder %s131, %s132
      %p143 = scmp.eq.s32.totalorder %s20, 0
      %p144 = por %p142, %p143
      %p145 = scmp.ne.s32.totalorder %s131, %s132
      %p146 = scmp.eq.s32.totalorder %s21, 1
      %p147 = por %p145, %p146
      %p149 = scmp.ne.s32.totalorder %s132, %s148
      %p150 = scmp.eq.s32.totalorder %s21, 0
      %p151 = por %p149, %p150
      %s152 = ssub.s32 %s22, %s34
      %p153 = scmp.eq.s32.totalorder %s152, 0
      %s155 = sadd.s32 %s154, 1
      %s156 = scalar_select %p153, %s154, %s155
      %p159 = pneg %p153
      %p160 = scmp.eq.s32.totalorder %s15, 1
      %p161 = por %p159, %p160
      %p162 = scmp.ne.s32.totalorder %s154, %s157
      %p163 = scmp.eq.s32.totalorder %s15, 0
      %p164 = por %p162, %p163
      %p165 = scmp.ne.s32.totalorder %s154, %s157
      %p166 = scmp.eq.s32.totalorder %s20, 1
      %p167 = por %p165, %p166
      %p168 = scmp.ne.s32.totalorder %s157, %s158
      %p169 = scmp.eq.s32.totalorder %s20, 0
      %p170 = por %p168, %p169
      %p171 = scmp.ne.s32.totalorder %s157, %s158
      %p172 = scmp.eq.s32.totalorder %s21, 1
      %p173 = por %p171, %p172
      %p175 = scmp.ne.s32.totalorder %s158, %s174
      %p176 = scmp.eq.s32.totalorder %s21, 0
      %p177 = por %p175, %p176
      %s179 = sadd.s32 %s178, 1
      %p182 = scmp.eq.s32.totalorder %s15, 1
      %p183 = scmp.ne.s32.totalorder %s178, %s180
      %p184 = scmp.eq.s32.totalorder %s15, 0
      %p185 = por %p183, %p184
      %p186 = scmp.ne.s32.totalorder %s178, %s180
      %p187 = scmp.eq.s32.totalorder %s20, 1
      %p188 = por %p186, %p187
      %p189 = scmp.ne.s32.totalorder %s180, %s181
      %p190 = scmp.eq.s32.totalorder %s20, 0
      %p191 = por %p189, %p190
      %p192 = scmp.ne.s32.totalorder %s180, %s181
      %p193 = scmp.eq.s32.totalorder %s21, 1
      %p194 = por %p192, %p193
      %p196 = scmp.ne.s32.totalorder %s181, %s195
      %p197 = scmp.eq.s32.totalorder %s21, 0
      %p198 = por %p196, %p197
      %s200 = sadd.s32 %s199, 1
      %p203 = scmp.eq.s32.totalorder %s15, 1
      %p204 = scmp.ne.s32.totalorder %s199, %s201
      %p205 = scmp.eq.s32.totalorder %s15, 0
      %p206 = por %p204, %p205
      %p207 = scmp.ne.s32.totalorder %s199, %s201
      %p208 = scmp.eq.s32.totalorder %s20, 1
      %p209 = por %p207, %p208
      %p210 = scmp.ne.s32.totalorder %s201, %s202
      %p211 = scmp.eq.s32.totalorder %s20, 0
      %p212 = por %p210, %p211
      %p213 = scmp.ne.s32.totalorder %s201, %s202
      %p214 = scmp.eq.s32.totalorder %s21, 1
      %p215 = por %p213, %p214
      %p217 = scmp.ne.s32.totalorder %s202, %s216
      %p218 = scmp.eq.s32.totalorder %s21, 0
      %p219 = por %p217, %p218
      %s220 = ssub.s32 %s22, %s34
      %p221 = scmp.eq.s32.totalorder %s220, 0
      %s223 = sadd.s32 %s222, 1
      %s224 = scalar_select %p221, %s222, %s223
      %p227 = pneg %p221
      %p228 = scmp.eq.s32.totalorder %s15, 1
      %p229 = por %p227, %p228
      %p230 = scmp.ne.s32.totalorder %s222, %s225
      %p231 = scmp.eq.s32.totalorder %s15, 0
      %p232 = por %p230, %p231
      %p233 = scmp.ne.s32.totalorder %s222, %s225
      %p234 = scmp.eq.s32.totalorder %s20, 1
      %p235 = por %p233, %p234
      %p236 = scmp.ne.s32.totalorder %s225, %s226
      %p237 = scmp.eq.s32.totalorder %s20, 0
      %p238 = por %p236, %p237
      %p239 = scmp.ne.s32.totalorder %s225, %s226
      %p240 = scmp.eq.s32.totalorder %s21, 1
      %p241 = por %p239, %p240
      %p243 = scmp.ne.s32.totalorder %s226, %s242
      %p244 = scmp.eq.s32.totalorder %s21, 0
      %p245 = por %p243, %p244
      %p246 = scmp.le.s32.totalorder 1, %s15
      %p247 = scmp.lt.s32.totalorder %s15, 3
      %p248 = pnand %p246, %p247
      %p249 = pneg %p248
      // Predicated region
      $region9: #{lstm_forward.1} parent=5 // pred_check
        _
      $region10: #{lstm_forward.1} parent=5 // pred_check_branch
        %251 = sbr.rel (%p248) target = $region12
      $region11: #{lstm_forward.1} parent=5 // pred_region
        %s252 = ssub.s32 %s15, 1
        // Predicated region
        $region13: #{lstm_forward.1} parent=11 // pred_check
          %p253 = pneg %p76
        $region14: #{lstm_forward.1} parent=11 // pred_check_branch
          %255 = sbr.rel (%p253) target = $region16
        $region15: #{lstm_forward.1} parent=11 // pred_region
          _
        $region16: #{lstm_forward.1} parent=11 // pred_fallthru
          _
        // Predicated region
        $region17: #{lstm_forward.1} parent=11 // pred_check
          %p256 = pneg %p97
        $region18: #{lstm_forward.1} parent=11 // pred_check_branch
          %258 = sbr.rel (%p256) target = $region20
        $region19: #{lstm_forward.1} parent=11 // pred_region
          %s260 = ssub.s32 8192, 8192
          %261 = vsyncadd [#allocation5], %s260
          %s262 = sshll.u32 [#allocation4], 4
          %s263 = int_to_ptr.vmem [resolvable:$true] %s262
          %268 = dma.hbm_to_vmem [thread:$0]  %s2, 8192, %s263, [#allocation5], 256, 256, 16
        $region20: #{lstm_forward.1} parent=11 // pred_fallthru
          _
        // Predicated region
        $region21: #{lstm_forward.1} parent=11 // pred_check
          %p269 = pneg %p118
        $region22: #{lstm_forward.1} parent=11 // pred_check_branch
          %271 = sbr.rel (%p269) target = $region24
        $region23: #{lstm_forward.1} parent=11 // pred_region
          _
        $region24: #{lstm_forward.1} parent=11 // pred_fallthru
          _
        // Predicated region
        $region25: #{lstm_forward.1} parent=11 // pred_check
          %p272 = pneg %p144
        $region26: #{lstm_forward.1} parent=11 // pred_check_branch
          %274 = sbr.rel (%p272) target = $region28
        $region27: #{lstm_forward.1} parent=11 // pred_region
          %p275 = scmp.lt.s32.totalorder %s24, 0
          %s276 = scalar_select %p275, %s24, 0
          %s277 = smul.addr %s276, 8
          %s278 = scalar_lea.vmem %s4, %s277
        $region28: #{lstm_forward.1} parent=11 // pred_fallthru
          _
        // Predicated region
        $region29: #{lstm_forward.1} parent=11 // pred_check
          %p279 = pneg %p170
        $region30: #{lstm_forward.1} parent=11 // pred_check_branch
          %281 = sbr.rel (%p279) target = $region32
        $region31: #{lstm_forward.1} parent=11 // pred_region
          %p282 = scmp.lt.s32.totalorder %s24, 0
          %s283 = scalar_select %p282, %s24, 0
          %s284 = smul.addr %s283, 8
          %s285 = scalar_lea.vmem %s5, %s284
        $region32: #{lstm_forward.1} parent=11 // pred_fallthru
          _
        // Predicated region
        $region33: #{lstm_forward.1} parent=11 // pred_check
          %p286 = pneg %p191
        $region34: #{lstm_forward.1} parent=11 // pred_check_branch
          %288 = sbr.rel (%p286) target = $region36
        $region35: #{lstm_forward.1} parent=11 // pred_region
          _
        $region36: #{lstm_forward.1} parent=11 // pred_fallthru
          _
        // Predicated region
        $region37: #{lstm_forward.1} parent=11 // pred_check
          %p289 = pneg %p212
        $region38: #{lstm_forward.1} parent=11 // pred_check_branch
          %291 = sbr.rel (%p289) target = $region40
        $region39: #{lstm_forward.1} parent=11 // pred_region
          _
        $region40: #{lstm_forward.1} parent=11 // pred_fallthru
          _
      $region12: #{lstm_forward.1} parent=5 // pred_fallthru
        _
      %p292 = scmp.lt.s32.totalorder %s15, 2
      // Predicated region
      $region41: #{lstm_forward.1} parent=5 // pred_check
        %p293 = pneg %p292
      $region42: #{lstm_forward.1} parent=5 // pred_check_branch
        %295 = sbr.rel (%p293) target = $region44
      $region43: #{lstm_forward.1} parent=5 // pred_region
        // Predicated region
        $region45: #{lstm_forward.1} parent=43 // pred_check
          %p296 = pneg %p49
        $region46: #{lstm_forward.1} parent=43 // pred_check_branch
          %298 = sbr.rel (%p296) target = $region48
        $region47: #{lstm_forward.1} parent=43 // pred_region
          %s299 = smul.u32 4, %s23
          %p300 = scmp.lt.s32.totalorder %s299, 7
          %s301 = scalar_select %p300, %s299, 7
          %p302 = scmp.lt.s32.totalorder %s22, 0
          %s303 = scalar_select %p302, %s22, 0
          %s304 = smul.addr %s303, 4
          %s305 = smul.addr %s301, 4
          %s306 = sadd.s32 %s304, %s305
          %s307 = smul.addr %s306, 4
          %s308 = scalar_lea.vmem %s0, %s307
          %s309 = smul.u32 4, %s23
        $region48: #{lstm_forward.1} parent=43 // pred_fallthru
          _
      $region44: #{lstm_forward.1} parent=5 // pred_fallthru
        _
      %p310 = scmp.le.s32.totalorder 1, %s15
      %p311 = scmp.lt.s32.totalorder %s15, 3
      %p312 = pnand %p310, %p311
      %p313 = pneg %p312
      // Predicated region
      $region49: #{lstm_forward.1} parent=5 // pred_check
        _
      $region50: #{lstm_forward.1} parent=5 // pred_check_branch
        %315 = sbr.rel (%p312) target = $region52
      $region51: #{lstm_forward.1} parent=5 // pred_region
        %s316 = ssub.s32 %s15, 1
        // Predicated region
        $region53: #{lstm_forward.1} parent=51 // pred_check
          %p317 = pneg %p97
        $region54: #{lstm_forward.1} parent=51 // pred_check_branch
          %319 = sbr.rel (%p317) target = $region56
        $region55: #{lstm_forward.1} parent=51 // pred_region
          %320 = dma.done [#allocation5], 8192
        $region56: #{lstm_forward.1} parent=51 // pred_fallthru
          _
        %s321 = smul.u32 4, %s25
        %p322 = scmp.lt.s32.totalorder %s321, 7
        %s323 = scalar_select %p322, %s321, 7
        %p324 = scmp.lt.s32.totalorder %s24, 0
        %s325 = scalar_select %p324, %s24, 0
        %s326 = smul.addr %s325, 4
        %s327 = smul.addr %s323, 4
        %s328 = sadd.s32 %s326, %s327
        %s329 = smul.addr %s328, 4
        %s330 = scalar_lea.vmem %s0, %s329
        %p331 = pneg %p55
        %p332 = pneg %p52
        %p333 = pneg %p76
        %p334 = pneg %p73
        %p335 = pneg %p97
        %p336 = pneg %p94
        %p337 = pneg %p118
        %p338 = pneg %p115
        %p339 = scmp.lt.s32.totalorder %s24, 0
        %s340 = scalar_select %p339, %s24, 0
        %s341 = smul.addr %s340, 8
        %s342 = scalar_lea.vmem %s4, %s341
        %p343 = pneg %p144
        %p344 = pneg %p141
        %p345 = scmp.lt.s32.totalorder %s24, 0
        %s346 = scalar_select %p345, %s24, 0
        %s347 = smul.addr %s346, 8
        %s348 = scalar_lea.vmem %s5, %s347
        %p349 = pneg %p170
        %p350 = pneg %p167
        %p351 = pneg %p191
        %p352 = pneg %p188
        %p353 = pneg %p212
        %p354 = pneg %p209
        %p355 = pneg %p238
        %p356 = pneg %p235
        %p357 = scmp.lt.s32.totalorder %s24, 0
        %s358 = scalar_select %p357, %s24, 0
        %s359 = smul.addr %s358, 8
        %s360 = scalar_lea.vmem %s8, %s359
        %s361 = smul.u32 4, %s25
        %p362 = scmp.lt.s32.totalorder %s361, 7
        %s363 = scalar_select %p362, %s361, 7
        %p364 = scmp.lt.s32.totalorder %s24, 0
        %s365 = scalar_select %p364, %s24, 0
        %s366 = smul.addr %s365, 4
        %s367 = smul.addr %s363, 4
        %s368 = sadd.s32 %s366, %s367
        %s369 = smul.addr %s368, 4
        %s370 = scalar_lea.vmem %s0, %s369
        %s371 = smul.u32 4, %s25
        %p372 = scmp.lt.s32.totalorder %s24, 0
        %s373 = scalar_select %p372, %s24, 0
        %s374 = smul.addr %s373, 8
        %s375 = scalar_lea.vmem %s4, %s374
        %p376 = scmp.lt.s32.totalorder %s24, 0
        %s377 = scalar_select %p376, %s24, 0
        %s378 = smul.addr %s377, 8
        %s379 = scalar_lea.vmem %s5, %s378
        %p380 = scmp.lt.s32.totalorder %s24, 0
        %s381 = scalar_select %p380, %s24, 0
        %s382 = smul.addr %s381, 8
        %s383 = scalar_lea.vmem %s8, %s382
        %p385 = scmp.eq.s32.totalorder %s25, 0
        // Predicated region
        $region57: #{lstm_forward.1} parent=51 // pred_check
          %p386 = pneg %p385
        $region58: #{lstm_forward.1} parent=51 // pred_check_branch
          %388 = sbr.rel (%p386) target = $region60
        $region59: #{lstm_forward.1} parent=51 // pred_region
          %v389 = vld [vmem:[%s375] sm:$0xff]
          %v390 = vld [vmem:[%s375 + $0x8] sm:$0xff]
          %391 = vst [vmem:[#allocation2] sm:$0xff] %v389
          %392 = vst [vmem:[#allocation2 + $0x8] sm:$0xff] %v390
          %v393 = vld [vmem:[%s379] sm:$0xff]
          %v394 = vld [vmem:[%s379 + $0x8] sm:$0xff]
          %395 = vst [vmem:[#allocation3] sm:$0xff] %v393
          %396 = vst [vmem:[#allocation3 + $0x8] sm:$0xff] %v394
        $region60: #{lstm_forward.1} parent=51 // pred_fallthru
          _
        %v397 = vld [vmem:[#allocation2] sm:$0xff]
        %s398 = scalar_lea.vmem [#allocation2], 8
        %v399 = vld [vmem:[%s398] sm:$0xff]
        %v400 = vld [vmem:[#allocation3] sm:$0xff]
        %s401 = scalar_lea.vmem [#allocation3], 8
        %v402 = vld [vmem:[%s401] sm:$0xff]
        %v403 = vld [vmem:[%s370] sm:$0xff]
        %v404 = vld [vmem:[%s370 + $0x8] sm:$0xff]
        %v405 = vunpack.c.l.bf16 %v403
        %v406 = vunpack.c.h.bf16 %v403
        %v407 = vunpack.c.l.bf16 %v404
        %v408 = vunpack.c.h.bf16 %v404
        %v409 = vpack.c.bf16 %v397, %v397
        %v410 = vld [vmem:[%s1] sm:$0xff]
        %v411 = vld [vmem:[%s1 + $0x8] sm:$0xff]
        %v412 = vld [vmem:[%s1 + $0x10] sm:$0xff]
        %v413 = vld [vmem:[%s1 + $0x18] sm:$0xff]
        %v414 = vld [vmem:[%s1 + $0x20] sm:$0xff]
        %v415 = vld [vmem:[%s1 + $0x28] sm:$0xff]
        %v416 = vld [vmem:[%s1 + $0x30] sm:$0xff]
        %v417 = vld [vmem:[%s1 + $0x38] sm:$0xff]
        %v418 = vld [vmem:[%s1 + $0x40] sm:$0xff]
        %v419 = vld [vmem:[%s1 + $0x48] sm:$0xff]
        %v420 = vld [vmem:[%s1 + $0x50] sm:$0xff]
        %v421 = vld [vmem:[%s1 + $0x58] sm:$0xff]
        %v422 = vld [vmem:[%s1 + $0x60] sm:$0xff]
        %v423 = vld [vmem:[%s1 + $0x68] sm:$0xff]
        %v424 = vld [vmem:[%s1 + $0x70] sm:$0xff]
        %v425 = vld [vmem:[%s1 + $0x78] sm:$0xff]
        %v426 = vld [vmem:[%s1 + $0x80] sm:$0xff]
        %v427 = vld [vmem:[%s1 + $0x88] sm:$0xff]
        %v428 = vld [vmem:[%s1 + $0x90] sm:$0xff]
        %v429 = vld [vmem:[%s1 + $0x98] sm:$0xff]
        %v430 = vld [vmem:[%s1 + $0xa0] sm:$0xff]
        %v431 = vld [vmem:[%s1 + $0xa8] sm:$0xff]
        %v432 = vld [vmem:[%s1 + $0xb0] sm:$0xff]
        %v433 = vld [vmem:[%s1 + $0xb8] sm:$0xff]
        %v434 = vld [vmem:[%s1 + $0xc0] sm:$0xff]
        %v435 = vld [vmem:[%s1 + $0xc8] sm:$0xff]
        %v436 = vld [vmem:[%s1 + $0xd0] sm:$0xff]
        %v437 = vld [vmem:[%s1 + $0xd8] sm:$0xff]
        %v438 = vld [vmem:[%s1 + $0xe0] sm:$0xff]
        %v439 = vld [vmem:[%s1 + $0xe8] sm:$0xff]
        %v440 = vld [vmem:[%s1 + $0xf0] sm:$0xff]
        %v441 = vld [vmem:[%s1 + $0xf8] sm:$0xff]
        %v474 = vunpack.c.l.b16 %v410
        %v475 = vunpack.c.h.b16 %v410
        %v476 = vunpack.c.l.b16 %v411
        %v477 = vunpack.c.h.b16 %v411
        %v478 = vunpack.c.l.b16 %v412
        %v479 = vunpack.c.h.b16 %v412
        %v480 = vunpack.c.l.b16 %v413
        %v481 = vunpack.c.h.b16 %v413
        %v482 = vunpack.c.l.b16 %v414
        %v483 = vunpack.c.h.b16 %v414
        %v484 = vunpack.c.l.b16 %v415
        %v485 = vunpack.c.h.b16 %v415
        %v486 = vunpack.c.l.b16 %v416
        %v487 = vunpack.c.h.b16 %v416
        %v488 = vunpack.c.l.b16 %v417
        %v489 = vunpack.c.h.b16 %v417
        %v490 = vunpack.c.l.b16 %v418
        %v491 = vunpack.c.h.b16 %v418
        %v492 = vunpack.c.l.b16 %v419
        %v493 = vunpack.c.h.b16 %v419
        %v494 = vunpack.c.l.b16 %v420
        %v495 = vunpack.c.h.b16 %v420
        %v496 = vunpack.c.l.b16 %v421
        %v497 = vunpack.c.h.b16 %v421
        %v498 = vunpack.c.l.b16 %v422
        %v499 = vunpack.c.h.b16 %v422
        %v500 = vunpack.c.l.b16 %v423
        %v501 = vunpack.c.h.b16 %v423
        %v502 = vunpack.c.l.b16 %v424
        %v503 = vunpack.c.h.b16 %v424
        %v504 = vunpack.c.l.b16 %v425
        %v505 = vunpack.c.h.b16 %v425
        %v506 = vunpack.c.l.b16 %v426
        %v507 = vunpack.c.h.b16 %v426
        %v508 = vunpack.c.l.b16 %v427
        %v509 = vunpack.c.h.b16 %v427
        %v510 = vunpack.c.l.b16 %v428
        %v511 = vunpack.c.h.b16 %v428
        %v512 = vunpack.c.l.b16 %v429
        %v513 = vunpack.c.h.b16 %v429
        %v514 = vunpack.c.l.b16 %v430
        %v515 = vunpack.c.h.b16 %v430
        %v516 = vunpack.c.l.b16 %v431
        %v517 = vunpack.c.h.b16 %v431
        %v518 = vunpack.c.l.b16 %v432
        %v519 = vunpack.c.h.b16 %v432
        %v520 = vunpack.c.l.b16 %v433
        %v521 = vunpack.c.h.b16 %v433
        %v522 = vunpack.c.l.b16 %v434
        %v523 = vunpack.c.h.b16 %v434
        %v524 = vunpack.c.l.b16 %v435
        %v525 = vunpack.c.h.b16 %v435
        %v526 = vunpack.c.l.b16 %v436
        %v527 = vunpack.c.h.b16 %v436
        %v528 = vunpack.c.l.b16 %v437
        %v529 = vunpack.c.h.b16 %v437
        %v530 = vunpack.c.l.b16 %v438
        %v531 = vunpack.c.h.b16 %v438
        %v532 = vunpack.c.l.b16 %v439
        %v533 = vunpack.c.h.b16 %v439
        %v534 = vunpack.c.l.b16 %v440
        %v535 = vunpack.c.h.b16 %v440
        %v536 = vunpack.c.l.b16 %v441
        %v537 = vunpack.c.h.b16 %v441
        %v538 = vpack.c.b16 %v478, %v474
        %v539 = vpack.c.b16 %v479, %v475
        %v540 = vpack.c.b16 %v480, %v476
        %v541 = vpack.c.b16 %v481, %v477
        %v542 = vpack.c.b16 %v486, %v482
        %v543 = vpack.c.b16 %v487, %v483
        %v544 = vpack.c.b16 %v488, %v484
        %v545 = vpack.c.b16 %v489, %v485
        %v546 = vpack.c.b16 %v494, %v490
        %v547 = vpack.c.b16 %v495, %v491
        %v548 = vpack.c.b16 %v496, %v492
        %v549 = vpack.c.b16 %v497, %v493
        %v550 = vpack.c.b16 %v502, %v498
        %v551 = vpack.c.b16 %v503, %v499
        %v552 = vpack.c.b16 %v504, %v500
        %v553 = vpack.c.b16 %v505, %v501
        %v554 = vpack.c.b16 %v510, %v506
        %v555 = vpack.c.b16 %v511, %v507
        %v556 = vpack.c.b16 %v512, %v508
        %v557 = vpack.c.b16 %v513, %v509
        %v558 = vpack.c.b16 %v518, %v514
        %v559 = vpack.c.b16 %v519, %v515
        %v560 = vpack.c.b16 %v520, %v516
        %v561 = vpack.c.b16 %v521, %v517
        %v562 = vpack.c.b16 %v526, %v522
        %v563 = vpack.c.b16 %v527, %v523
        %v564 = vpack.c.b16 %v528, %v524
        %v565 = vpack.c.b16 %v529, %v525
        %v566 = vpack.c.b16 %v534, %v530
        %v567 = vpack.c.b16 %v535, %v531
        %v568 = vpack.c.b16 %v536, %v532
        %v569 = vpack.c.b16 %v537, %v533
        %602 = vmatprep.subr.bf16.mxu0 %v539
        %603 = vmatpush1.bf16.msra.mxu0 %v538
        %604 = vmatprep.subr.bf16.mxu0 %v543
        %605 = vmatpush1.bf16.msra.mxu0 %v542
        %606 = vmatprep.subr.bf16.mxu0 %v547
        %607 = vmatpush1.bf16.msra.mxu0 %v546
        %608 = vmatprep.subr.bf16.mxu0 %v551
        %609 = vmatpush1.bf16.msra.mxu0 %v550
        %610 = vmatprep.subr.bf16.mxu0 %v555
        %611 = vmatpush1.bf16.msra.mxu0 %v554
        %612 = vmatprep.subr.bf16.mxu0 %v559
        %613 = vmatpush1.bf16.msra.mxu0 %v558
        %614 = vmatprep.subr.bf16.mxu0 %v563
        %615 = vmatpush1.bf16.msra.mxu0 %v562
        %616 = vmatprep.subr.bf16.mxu0 %v567
        %617 = vmatpush1.bf16.msra.mxu0 %v566
        %618 = vmatprep.subr.bf16.mxu0 0
        %619 = vmatpush1.bf16.msra.mxu0 0
        %620 = vmatprep.subr.bf16.mxu0 0
        %621 = vmatpush1.bf16.msra.mxu0 0
        %622 = vmatprep.subr.bf16.mxu0 0
        %623 = vmatpush1.bf16.msra.mxu0 0
        %624 = vmatprep.subr.bf16.mxu0 0
        %625 = vmatpush1.bf16.msra.mxu0 0
        %626 = vmatprep.subr.bf16.mxu0 0
        %627 = vmatpush1.bf16.msra.mxu0 0
        %628 = vmatprep.subr.bf16.mxu0 0
        %629 = vmatpush1.bf16.msra.mxu0 0
        %630 = vmatprep.subr.bf16.mxu0 0
        %631 = vmatpush1.bf16.msra.mxu0 0
        %632 = vmatprep.subr.bf16.mxu0 0
        %633 = vmatpush1.bf16.msra.mxu0 0
        %634 = vmatprep.mubr.bf16.mxu0 0
        %635 = vmatmul.mubr.bf16.gmra.mrb[0].mxu0 %v409
        %v636 = vpop.f32.mrb[0].mxu0
        %v637 = vadd.f32 0.0, %v636
        %v638 = vpop.f32.mrb[0].mxu0
        %v639 = vadd.f32 0.0, %v638
        %v640 = vpop.f32.mrb[0].mxu0
        %v641 = vpop.f32.mrb[0].mxu0
        %642 = vdwg.mxu0
        %643 = vmatprep.subr.bf16.mxu0 %v541
        %644 = vmatpush1.bf16.msra.mxu0 %v540
        %645 = vmatprep.subr.bf16.mxu0 %v545
        %646 = vmatpush1.bf16.msra.mxu0 %v544
        %647 = vmatprep.subr.bf16.mxu0 %v549
        %648 = vmatpush1.bf16.msra.mxu0 %v548
        %649 = vmatprep.subr.bf16.mxu0 %v553
        %650 = vmatpush1.bf16.msra.mxu0 %v552
        %651 = vmatprep.subr.bf16.mxu0 %v557
        %652 = vmatpush1.bf16.msra.mxu0 %v556
        %653 = vmatprep.subr.bf16.mxu0 %v561
        %654 = vmatpush1.bf16.msra.mxu0 %v560
        %655 = vmatprep.subr.bf16.mxu0 %v565
        %656 = vmatpush1.bf16.msra.mxu0 %v564
        %657 = vmatprep.subr.bf16.mxu0 %v569
        %658 = vmatpush1.bf16.msra.mxu0 %v568
        %659 = vmatprep.subr.bf16.mxu0 0
        %660 = vmatpush1.bf16.msra.mxu0 0
        %661 = vmatprep.subr.bf16.mxu0 0
        %662 = vmatpush1.bf16.msra.mxu0 0
        %663 = vmatprep.subr.bf16.mxu0 0
        %664 = vmatpush1.bf16.msra.mxu0 0
        %665 = vmatprep.subr.bf16.mxu0 0
        %666 = vmatpush1.bf16.msra.mxu0 0
        %667 = vmatprep.subr.bf16.mxu0 0
        %668 = vmatpush1.bf16.msra.mxu0 0
        %669 = vmatprep.subr.bf16.mxu0 0
        %670 = vmatpush1.bf16.msra.mxu0 0
        %671 = vmatprep.subr.bf16.mxu0 0
        %672 = vmatpush1.bf16.msra.mxu0 0
        %673 = vmatprep.subr.bf16.mxu0 0
        %674 = vmatpush1.bf16.msra.mxu0 0
        %675 = vmatprep.mubr.bf16.mxu0 0
        %676 = vmatmul.mubr.bf16.gmra.mrb[0].mxu0 %v409
        %v677 = vpop.f32.mrb[0].mxu0
        %v678 = vadd.f32 0.0, %v677
        %v679 = vpop.f32.mrb[0].mxu0
        %v680 = vadd.f32 0.0, %v679
        %v681 = vpop.f32.mrb[0].mxu0
        %v682 = vpop.f32.mrb[0].mxu0
        %683 = vdwg.mxu0
        %v684 = vadd.f32 %v405, %v637
        %v685 = vadd.f32 %v406, %v639
        %v686 = vadd.f32 %v407, %v678
        %v687 = vadd.f32 %v408, %v680
        %v688 = vxor.u32 %v684, 2147483648
        %v689 = vmul.f32 %v688, 1.442695
        %v690 = vpow.pop %v689
        %v691 = vadd.f32 %v690, 1.0
        %v692 = vrcp.pop %v691
        %v693 = vmul.f32 1.0, %v692
        %v694 = vxor.u32 %v685, 2147483648
        %v695 = vmul.f32 %v694, 1.442695
        %v696 = vpow.pop %v695
        %v697 = vadd.f32 %v696, 1.0
        %v698 = vrcp.pop %v697
        %v699 = vmul.f32 1.0, %v698
        %v700 = vtanh.pop %v686
        %v701 = vxor.u32 %v687, 2147483648
        %v702 = vmul.f32 %v701, 1.442695
        %v703 = vpow.pop %v702
        %v704 = vadd.f32 %v703, 1.0
        %v705 = vrcp.pop %v704
        %v706 = vmul.f32 1.0, %v705
        %v707 = vmul.f32 %v699, %v400
        %v708 = vmul.f32 %v693, %v700
        %v709 = vadd.f32 %v707, %v708
        %v710 = vtanh.pop %v709
        %v711 = vmul.f32 %v706, %v710
        %v712 = vpack.c.bf16 %v711, %v711
        %v713 = vpack.c.bf16 %v399, %v399
        %v714 = vld [vmem:[#allocation4] sm:$0xff]
        %v715 = vld [vmem:[#allocation4 + $0x8] sm:$0xff]
        %v716 = vld [vmem:[#allocation4 + $0x10] sm:$0xff]
        %v717 = vld [vmem:[#allocation4 + $0x18] sm:$0xff]
        %v718 = vld [vmem:[#allocation4 + $0x20] sm:$0xff]
        %v719 = vld [vmem:[#allocation4 + $0x28] sm:$0xff]
        %v720 = vld [vmem:[#allocation4 + $0x30] sm:$0xff]
        %v721 = vld [vmem:[#allocation4 + $0x38] sm:$0xff]
        %v722 = vld [vmem:[#allocation4 + $0x40] sm:$0xff]
        %v723 = vld [vmem:[#allocation4 + $0x48] sm:$0xff]
        %v724 = vld [vmem:[#allocation4 + $0x50] sm:$0xff]
        %v725 = vld [vmem:[#allocation4 + $0x58] sm:$0xff]
        %v726 = vld [vmem:[#allocation4 + $0x60] sm:$0xff]
        %v727 = vld [vmem:[#allocation4 + $0x68] sm:$0xff]
        %v728 = vld [vmem:[#allocation4 + $0x70] sm:$0xff]
        %v729 = vld [vmem:[#allocation4 + $0x78] sm:$0xff]
        %v730 = vld [vmem:[#allocation4 + $0x80] sm:$0xff]
        %v731 = vld [vmem:[#allocation4 + $0x88] sm:$0xff]
        %v732 = vld [vmem:[#allocation4 + $0x90] sm:$0xff]
        %v733 = vld [vmem:[#allocation4 + $0x98] sm:$0xff]
        %v734 = vld [vmem:[#allocation4 + $0xa0] sm:$0xff]
        %v735 = vld [vmem:[#allocation4 + $0xa8] sm:$0xff]
        %v736 = vld [vmem:[#allocation4 + $0xb0] sm:$0xff]
        %v737 = vld [vmem:[#allocation4 + $0xb8] sm:$0xff]
        %v738 = vld [vmem:[#allocation4 + $0xc0] sm:$0xff]
        %v739 = vld [vmem:[#allocation4 + $0xc8] sm:$0xff]
        %v740 = vld [vmem:[#allocation4 + $0xd0] sm:$0xff]
        %v741 = vld [vmem:[#allocation4 + $0xd8] sm:$0xff]
        %v742 = vld [vmem:[#allocation4 + $0xe0] sm:$0xff]
        %v743 = vld [vmem:[#allocation4 + $0xe8] sm:$0xff]
        %v744 = vld [vmem:[#allocation4 + $0xf0] sm:$0xff]
        %v745 = vld [vmem:[#allocation4 + $0xf8] sm:$0xff]
        %v746 = vld [vmem:[#allocation4 + $0x100] sm:$0xff]
        %v747 = vld [vmem:[#allocation4 + $0x108] sm:$0xff]
        %v748 = vld [vmem:[#allocation4 + $0x110] sm:$0xff]
        %v749 = vld [vmem:[#allocation4 + $0x118] sm:$0xff]
        %v750 = vld [vmem:[#allocation4 + $0x120] sm:$0xff]
        %v751 = vld [vmem:[#allocation4 + $0x128] sm:$0xff]
        %v752 = vld [vmem:[#allocation4 + $0x130] sm:$0xff]
        %v753 = vld [vmem:[#allocation4 + $0x138] sm:$0xff]
        %v754 = vld [vmem:[#allocation4 + $0x140] sm:$0xff]
        %v755 = vld [vmem:[#allocation4 + $0x148] sm:$0xff]
        %v756 = vld [vmem:[#allocation4 + $0x150] sm:$0xff]
        %v757 = vld [vmem:[#allocation4 + $0x158] sm:$0xff]
        %v758 = vld [vmem:[#allocation4 + $0x160] sm:$0xff]
        %v759 = vld [vmem:[#allocation4 + $0x168] sm:$0xff]
        %v760 = vld [vmem:[#allocation4 + $0x170] sm:$0xff]
        %v761 = vld [vmem:[#allocation4 + $0x178] sm:$0xff]
        %v762 = vld [vmem:[#allocation4 + $0x180] sm:$0xff]
        %v763 = vld [vmem:[#allocation4 + $0x188] sm:$0xff]
        %v764 = vld [vmem:[#allocation4 + $0x190] sm:$0xff]
        %v765 = vld [vmem:[#allocation4 + $0x198] sm:$0xff]
        %v766 = vld [vmem:[#allocation4 + $0x1a0] sm:$0xff]
        %v767 = vld [vmem:[#allocation4 + $0x1a8] sm:$0xff]
        %v768 = vld [vmem:[#allocation4 + $0x1b0] sm:$0xff]
        %v769 = vld [vmem:[#allocation4 + $0x1b8] sm:$0xff]
        %v770 = vld [vmem:[#allocation4 + $0x1c0] sm:$0xff]
        %v771 = vld [vmem:[#allocation4 + $0x1c8] sm:$0xff]
        %v772 = vld [vmem:[#allocation4 + $0x1d0] sm:$0xff]
        %v773 = vld [vmem:[#allocation4 + $0x1d8] sm:$0xff]
        %v774 = vld [vmem:[#allocation4 + $0x1e0] sm:$0xff]
        %v775 = vld [vmem:[#allocation4 + $0x1e8] sm:$0xff]
        %v776 = vld [vmem:[#allocation4 + $0x1f0] sm:$0xff]
        %v777 = vld [vmem:[#allocation4 + $0x1f8] sm:$0xff]
        %v778 = vld [vmem:[%s3] sm:$0xf]
        %v780 = vlaneseq
        %v781 = vshrl.u32 %v780, 7
        %v782 = vsub.s32 0, %v781
        %v783 = vrot.slane %v778, %v782
        %v784 = vlaneseq
        %v785 = vshrl.u32 %v784, 7
        %v786 = vsub.s32 1, %v785
        %v787 = vrot.slane %v778, %v786
        %v788 = vlaneseq
        %v789 = vshrl.u32 %v788, 7
        %v790 = vsub.s32 2, %v789
        %v791 = vrot.slane %v778, %v790
        %v792 = vlaneseq
        %v793 = vshrl.u32 %v792, 7
        %v794 = vsub.s32 3, %v793
        %v795 = vrot.slane %v778, %v794
        %v864 = vunpack.c.l.b16 %v714
        %v865 = vunpack.c.h.b16 %v714
        %v866 = vunpack.c.l.b16 %v715
        %v867 = vunpack.c.h.b16 %v715
        %v868 = vunpack.c.l.b16 %v716
        %v869 = vunpack.c.h.b16 %v716
        %v870 = vunpack.c.l.b16 %v717
        %v871 = vunpack.c.h.b16 %v717
        %v872 = vunpack.c.l.b16 %v718
        %v873 = vunpack.c.h.b16 %v718
        %v874 = vunpack.c.l.b16 %v719
        %v875 = vunpack.c.h.b16 %v719
        %v876 = vunpack.c.l.b16 %v720
        %v877 = vunpack.c.h.b16 %v720
        %v878 = vunpack.c.l.b16 %v721
        %v879 = vunpack.c.h.b16 %v721
        %v880 = vunpack.c.l.b16 %v722
        %v881 = vunpack.c.h.b16 %v722
        %v882 = vunpack.c.l.b16 %v723
        %v883 = vunpack.c.h.b16 %v723
        %v884 = vunpack.c.l.b16 %v724
        %v885 = vunpack.c.h.b16 %v724
        %v886 = vunpack.c.l.b16 %v725
        %v887 = vunpack.c.h.b16 %v725
        %v888 = vunpack.c.l.b16 %v726
        %v889 = vunpack.c.h.b16 %v726
        %v890 = vunpack.c.l.b16 %v727
        %v891 = vunpack.c.h.b16 %v727
        %v892 = vunpack.c.l.b16 %v728
        %v893 = vunpack.c.h.b16 %v728
        %v894 = vunpack.c.l.b16 %v729
        %v895 = vunpack.c.h.b16 %v729
        %v896 = vunpack.c.l.b16 %v730
        %v897 = vunpack.c.h.b16 %v730
        %v898 = vunpack.c.l.b16 %v731
        %v899 = vunpack.c.h.b16 %v731
        %v900 = vunpack.c.l.b16 %v732
        %v901 = vunpack.c.h.b16 %v732
        %v902 = vunpack.c.l.b16 %v733
        %v903 = vunpack.c.h.b16 %v733
        %v904 = vunpack.c.l.b16 %v734
        %v905 = vunpack.c.h.b16 %v734
        %v906 = vunpack.c.l.b16 %v735
        %v907 = vunpack.c.h.b16 %v735
        %v908 = vunpack.c.l.b16 %v736
        %v909 = vunpack.c.h.b16 %v736
        %v910 = vunpack.c.l.b16 %v737
        %v911 = vunpack.c.h.b16 %v737
        %v912 = vunpack.c.l.b16 %v738
        %v913 = vunpack.c.h.b16 %v738
        %v914 = vunpack.c.l.b16 %v739
        %v915 = vunpack.c.h.b16 %v739
        %v916 = vunpack.c.l.b16 %v740
        %v917 = vunpack.c.h.b16 %v740
        %v918 = vunpack.c.l.b16 %v741
        %v919 = vunpack.c.h.b16 %v741
        %v920 = vunpack.c.l.b16 %v742
        %v921 = vunpack.c.h.b16 %v742
        %v922 = vunpack.c.l.b16 %v743
        %v923 = vunpack.c.h.b16 %v743
        %v924 = vunpack.c.l.b16 %v744
        %v925 = vunpack.c.h.b16 %v744
        %v926 = vunpack.c.l.b16 %v745
        %v927 = vunpack.c.h.b16 %v745
        %v928 = vunpack.c.l.b16 %v746
        %v929 = vunpack.c.h.b16 %v746
        %v930 = vunpack.c.l.b16 %v747
        %v931 = vunpack.c.h.b16 %v747
        %v932 = vunpack.c.l.b16 %v748
        %v933 = vunpack.c.h.b16 %v748
        %v934 = vunpack.c.l.b16 %v749
        %v935 = vunpack.c.h.b16 %v749
        %v936 = vunpack.c.l.b16 %v750
        %v937 = vunpack.c.h.b16 %v750
        %v938 = vunpack.c.l.b16 %v751
        %v939 = vunpack.c.h.b16 %v751
        %v940 = vunpack.c.l.b16 %v752
        %v941 = vunpack.c.h.b16 %v752
        %v942 = vunpack.c.l.b16 %v753
        %v943 = vunpack.c.h.b16 %v753
        %v944 = vunpack.c.l.b16 %v754
        %v945 = vunpack.c.h.b16 %v754
        %v946 = vunpack.c.l.b16 %v755
        %v947 = vunpack.c.h.b16 %v755
        %v948 = vunpack.c.l.b16 %v756
        %v949 = vunpack.c.h.b16 %v756
        %v950 = vunpack.c.l.b16 %v757
        %v951 = vunpack.c.h.b16 %v757
        %v952 = vunpack.c.l.b16 %v758
        %v953 = vunpack.c.h.b16 %v758
        %v954 = vunpack.c.l.b16 %v759
        %v955 = vunpack.c.h.b16 %v759
        %v956 = vunpack.c.l.b16 %v760
        %v957 = vunpack.c.h.b16 %v760
        %v958 = vunpack.c.l.b16 %v761
        %v959 = vunpack.c.h.b16 %v761
        %v960 = vunpack.c.l.b16 %v762
        %v961 = vunpack.c.h.b16 %v762
        %v962 = vunpack.c.l.b16 %v763
        %v963 = vunpack.c.h.b16 %v763
        %v964 = vunpack.c.l.b16 %v764
        %v965 = vunpack.c.h.b16 %v764
        %v966 = vunpack.c.l.b16 %v765
        %v967 = vunpack.c.h.b16 %v765
        %v968 = vunpack.c.l.b16 %v766
        %v969 = vunpack.c.h.b16 %v766
        %v970 = vunpack.c.l.b16 %v767
        %v971 = vunpack.c.h.b16 %v767
        %v972 = vunpack.c.l.b16 %v768
        %v973 = vunpack.c.h.b16 %v768
        %v974 = vunpack.c.l.b16 %v769
        %v975 = vunpack.c.h.b16 %v769
        %v976 = vunpack.c.l.b16 %v770
        %v977 = vunpack.c.h.b16 %v770
        %v978 = vunpack.c.l.b16 %v771
        %v979 = vunpack.c.h.b16 %v771
        %v980 = vunpack.c.l.b16 %v772
        %v981 = vunpack.c.h.b16 %v772
        %v982 = vunpack.c.l.b16 %v773
        %v983 = vunpack.c.h.b16 %v773
        %v984 = vunpack.c.l.b16 %v774
        %v985 = vunpack.c.h.b16 %v774
        %v986 = vunpack.c.l.b16 %v775
        %v987 = vunpack.c.h.b16 %v775
        %v988 = vunpack.c.l.b16 %v776
        %v989 = vunpack.c.h.b16 %v776
        %v990 = vunpack.c.l.b16 %v777
        %v991 = vunpack.c.h.b16 %v777
        %v992 = vpack.c.b16 %v868, %v864
        %v993 = vpack.c.b16 %v869, %v865
        %v994 = vpack.c.b16 %v870, %v866
        %v995 = vpack.c.b16 %v871, %v867
        %v996 = vpack.c.b16 %v876, %v872
        %v997 = vpack.c.b16 %v877, %v873
        %v998 = vpack.c.b16 %v878, %v874
        %v999 = vpack.c.b16 %v879, %v875
        %v1000 = vpack.c.b16 %v884, %v880
        %v1001 = vpack.c.b16 %v885, %v881
        %v1002 = vpack.c.b16 %v886, %v882
        %v1003 = vpack.c.b16 %v887, %v883
        %v1004 = vpack.c.b16 %v892, %v888
        %v1005 = vpack.c.b16 %v893, %v889
        %v1006 = vpack.c.b16 %v894, %v890
        %v1007 = vpack.c.b16 %v895, %v891
        %v1008 = vpack.c.b16 %v900, %v896
        %v1009 = vpack.c.b16 %v901, %v897
        %v1010 = vpack.c.b16 %v902, %v898
        %v1011 = vpack.c.b16 %v903, %v899
        %v1012 = vpack.c.b16 %v908, %v904
        %v1013 = vpack.c.b16 %v909, %v905
        %v1014 = vpack.c.b16 %v910, %v906
        %v1015 = vpack.c.b16 %v911, %v907
        %v1016 = vpack.c.b16 %v916, %v912
        %v1017 = vpack.c.b16 %v917, %v913
        %v1018 = vpack.c.b16 %v918, %v914
        %v1019 = vpack.c.b16 %v919, %v915
        %v1020 = vpack.c.b16 %v924, %v920
        %v1021 = vpack.c.b16 %v925, %v921
        %v1022 = vpack.c.b16 %v926, %v922
        %v1023 = vpack.c.b16 %v927, %v923
        %v1024 = vpack.c.b16 %v932, %v928
        %v1025 = vpack.c.b16 %v933, %v929
        %v1026 = vpack.c.b16 %v934, %v930
        %v1027 = vpack.c.b16 %v935, %v931
        %v1028 = vpack.c.b16 %v940, %v936
        %v1029 = vpack.c.b16 %v941, %v937
        %v1030 = vpack.c.b16 %v942, %v938
        %v1031 = vpack.c.b16 %v943, %v939
        %v1032 = vpack.c.b16 %v948, %v944
        %v1033 = vpack.c.b16 %v949, %v945
        %v1034 = vpack.c.b16 %v950, %v946
        %v1035 = vpack.c.b16 %v951, %v947
        %v1036 = vpack.c.b16 %v956, %v952
        %v1037 = vpack.c.b16 %v957, %v953
        %v1038 = vpack.c.b16 %v958, %v954
        %v1039 = vpack.c.b16 %v959, %v955
        %v1040 = vpack.c.b16 %v964, %v960
        %v1041 = vpack.c.b16 %v965, %v961
        %v1042 = vpack.c.b16 %v966, %v962
        %v1043 = vpack.c.b16 %v967, %v963
        %v1044 = vpack.c.b16 %v972, %v968
        %v1045 = vpack.c.b16 %v973, %v969
        %v1046 = vpack.c.b16 %v974, %v970
        %v1047 = vpack.c.b16 %v975, %v971
        %v1048 = vpack.c.b16 %v980, %v976
        %v1049 = vpack.c.b16 %v981, %v977
        %v1050 = vpack.c.b16 %v982, %v978
        %v1051 = vpack.c.b16 %v983, %v979
        %v1052 = vpack.c.b16 %v988, %v984
        %v1053 = vpack.c.b16 %v989, %v985
        %v1054 = vpack.c.b16 %v990, %v986
        %v1055 = vpack.c.b16 %v991, %v987
        %1120 = vmatprep.subr.bf16.mxu0 %v993
        %1121 = vmatpush1.bf16.msra.mxu0 %v992
        %1122 = vmatprep.subr.bf16.mxu0 %v997
        %1123 = vmatpush1.bf16.msra.mxu0 %v996
        %1124 = vmatprep.subr.bf16.mxu0 %v1001
        %1125 = vmatpush1.bf16.msra.mxu0 %v1000
        %1126 = vmatprep.subr.bf16.mxu0 %v1005
        %1127 = vmatpush1.bf16.msra.mxu0 %v1004
        %1128 = vmatprep.subr.bf16.mxu0 %v1009
        %1129 = vmatpush1.bf16.msra.mxu0 %v1008
        %1130 = vmatprep.subr.bf16.mxu0 %v1013
        %1131 = vmatpush1.bf16.msra.mxu0 %v1012
        %1132 = vmatprep.subr.bf16.mxu0 %v1017
        %1133 = vmatpush1.bf16.msra.mxu0 %v1016
        %1134 = vmatprep.subr.bf16.mxu0 %v1021
        %1135 = vmatpush1.bf16.msra.mxu0 %v1020
        %1136 = vmatprep.subr.bf16.mxu0 %v1025
        %1137 = vmatpush1.bf16.msra.mxu0 %v1024
        %1138 = vmatprep.subr.bf16.mxu0 %v1029
        %1139 = vmatpush1.bf16.msra.mxu0 %v1028
        %1140 = vmatprep.subr.bf16.mxu0 %v1033
        %1141 = vmatpush1.bf16.msra.mxu0 %v1032
        %1142 = vmatprep.subr.bf16.mxu0 %v1037
        %1143 = vmatpush1.bf16.msra.mxu0 %v1036
        %1144 = vmatprep.subr.bf16.mxu0 %v1041
        %1145 = vmatpush1.bf16.msra.mxu0 %v1040
        %1146 = vmatprep.subr.bf16.mxu0 %v1045
        %1147 = vmatpush1.bf16.msra.mxu0 %v1044
        %1148 = vmatprep.subr.bf16.mxu0 %v1049
        %1149 = vmatpush1.bf16.msra.mxu0 %v1048
        %1150 = vmatprep.subr.bf16.mxu0 %v1053
        %1151 = vmatpush1.bf16.msra.mxu0 %v1052
        %1152 = vmatprep.mubr.bf16.mxu0 %v713
        %1153 = vmatmul.mubr.bf16.gmra.mrb[0].mxu0 %v712
        %v1154 = vpop.f32.mrb[0].mxu0
        %v1155 = vadd.f32 %v783, %v1154
        %v1156 = vpop.f32.mrb[0].mxu0
        %v1157 = vadd.f32 %v787, %v1156
        %v1158 = vpop.f32.mrb[0].mxu0
        %v1159 = vpop.f32.mrb[0].mxu0
        %1160 = vdwg.mxu0
        %1161 = vmatprep.subr.bf16.mxu0 %v995
        %1162 = vmatpush1.bf16.msra.mxu0 %v994
        %1163 = vmatprep.subr.bf16.mxu0 %v999
        %1164 = vmatpush1.bf16.msra.mxu0 %v998
        %1165 = vmatprep.subr.bf16.mxu0 %v1003
        %1166 = vmatpush1.bf16.msra.mxu0 %v1002
        %1167 = vmatprep.subr.bf16.mxu0 %v1007
        %1168 = vmatpush1.bf16.msra.mxu0 %v1006
        %1169 = vmatprep.subr.bf16.mxu0 %v1011
        %1170 = vmatpush1.bf16.msra.mxu0 %v1010
        %1171 = vmatprep.subr.bf16.mxu0 %v1015
        %1172 = vmatpush1.bf16.msra.mxu0 %v1014
        %1173 = vmatprep.subr.bf16.mxu0 %v1019
        %1174 = vmatpush1.bf16.msra.mxu0 %v1018
        %1175 = vmatprep.subr.bf16.mxu0 %v1023
        %1176 = vmatpush1.bf16.msra.mxu0 %v1022
        %1177 = vmatprep.subr.bf16.mxu0 %v1027
        %1178 = vmatpush1.bf16.msra.mxu0 %v1026
        %1179 = vmatprep.subr.bf16.mxu0 %v1031
        %1180 = vmatpush1.bf16.msra.mxu0 %v1030
        %1181 = vmatprep.subr.bf16.mxu0 %v1035
        %1182 = vmatpush1.bf16.msra.mxu0 %v1034
        %1183 = vmatprep.subr.bf16.mxu0 %v1039
        %1184 = vmatpush1.bf16.msra.mxu0 %v1038
        %1185 = vmatprep.subr.bf16.mxu0 %v1043
        %1186 = vmatpush1.bf16.msra.mxu0 %v1042
        %1187 = vmatprep.subr.bf16.mxu0 %v1047
        %1188 = vmatpush1.bf16.msra.mxu0 %v1046
        %1189 = vmatprep.subr.bf16.mxu0 %v1051
        %1190 = vmatpush1.bf16.msra.mxu0 %v1050
        %1191 = vmatprep.subr.bf16.mxu0 %v1055
        %1192 = vmatpush1.bf16.msra.mxu0 %v1054
        %1193 = vmatprep.mubr.bf16.mxu0 %v713
        %1194 = vmatmul.mubr.bf16.gmra.mrb[0].mxu0 %v712
        %v1195 = vpop.f32.mrb[0].mxu0
        %v1196 = vadd.f32 %v791, %v1195
        %v1197 = vpop.f32.mrb[0].mxu0
        %v1198 = vadd.f32 %v795, %v1197
        %v1199 = vpop.f32.mrb[0].mxu0
        %v1200 = vpop.f32.mrb[0].mxu0
        %1201 = vdwg.mxu0
        %v1202 = vxor.u32 %v1155, 2147483648
        %v1203 = vmul.f32 %v1202, 1.442695
        %v1204 = vpow.pop %v1203
        %v1205 = vadd.f32 %v1204, 1.0
        %v1206 = vrcp.pop %v1205
        %v1207 = vmul.f32 1.0, %v1206
        %v1208 = vxor.u32 %v1157, 2147483648
        %v1209 = vmul.f32 %v1208, 1.442695
        %v1210 = vpow.pop %v1209
        %v1211 = vadd.f32 %v1210, 1.0
        %v1212 = vrcp.pop %v1211
        %v1213 = vmul.f32 1.0, %v1212
        %v1214 = vtanh.pop %v1196
        %v1215 = vxor.u32 %v1198, 2147483648
        %v1216 = vmul.f32 %v1215, 1.442695
        %v1217 = vpow.pop %v1216
        %v1218 = vadd.f32 %v1217, 1.0
        %v1219 = vrcp.pop %v1218
        %v1220 = vmul.f32 1.0, %v1219
        %v1221 = vmul.f32 %v1213, %v402
        %v1222 = vmul.f32 %v1207, %v1214
        %v1223 = vadd.f32 %v1221, %v1222
        %v1224 = vtanh.pop %v1223
        %v1225 = vmul.f32 %v1220, %v1224
        %s1226 = scalar_lea.vmem %s370, 16
        %v1227 = vld [vmem:[%s1226] sm:$0xff]
        %v1228 = vld [vmem:[%s1226 + $0x8] sm:$0xff]
        %v1229 = vunpack.c.l.bf16 %v1227
        %v1230 = vunpack.c.h.bf16 %v1227
        %v1231 = vunpack.c.l.bf16 %v1228
        %v1232 = vunpack.c.h.bf16 %v1228
        %1233 = vmatprep.subr.bf16.mxu0 %v539
        %1234 = vmatpush1.bf16.msra.mxu0 %v538
        %1235 = vmatprep.subr.bf16.mxu0 %v543
        %1236 = vmatpush1.bf16.msra.mxu0 %v542
        %1237 = vmatprep.subr.bf16.mxu0 %v547
        %1238 = vmatpush1.bf16.msra.mxu0 %v546
        %1239 = vmatprep.subr.bf16.mxu0 %v551
        %1240 = vmatpush1.bf16.msra.mxu0 %v550
        %1241 = vmatprep.subr.bf16.mxu0 %v555
        %1242 = vmatpush1.bf16.msra.mxu0 %v554
        %1243 = vmatprep.subr.bf16.mxu0 %v559
        %1244 = vmatpush1.bf16.msra.mxu0 %v558
        %1245 = vmatprep.subr.bf16.mxu0 %v563
        %1246 = vmatpush1.bf16.msra.mxu0 %v562
        %1247 = vmatprep.subr.bf16.mxu0 %v567
        %1248 = vmatpush1.bf16.msra.mxu0 %v566
        %1249 = vmatprep.subr.bf16.mxu0 0
        %1250 = vmatpush1.bf16.msra.mxu0 0
        %1251 = vmatprep.subr.bf16.mxu0 0
        %1252 = vmatpush1.bf16.msra.mxu0 0
        %1253 = vmatprep.subr.bf16.mxu0 0
        %1254 = vmatpush1.bf16.msra.mxu0 0
        %1255 = vmatprep.subr.bf16.mxu0 0
        %1256 = vmatpush1.bf16.msra.mxu0 0
        %1257 = vmatprep.subr.bf16.mxu0 0
        %1258 = vmatpush1.bf16.msra.mxu0 0
        %1259 = vmatprep.subr.bf16.mxu0 0
        %1260 = vmatpush1.bf16.msra.mxu0 0
        %1261 = vmatprep.subr.bf16.mxu0 0
        %1262 = vmatpush1.bf16.msra.mxu0 0
        %1263 = vmatprep.subr.bf16.mxu0 0
        %1264 = vmatpush1.bf16.msra.mxu0 0
        %1265 = vmatprep.mubr.bf16.mxu0 0
        %1266 = vmatmul.mubr.bf16.gmra.mrb[0].mxu0 %v712
        %v1267 = vpop.f32.mrb[0].mxu0
        %v1268 = vadd.f32 0.0, %v1267
        %v1269 = vpop.f32.mrb[0].mxu0
        %v1270 = vadd.f32 0.0, %v1269
        %v1271 = vpop.f32.mrb[0].mxu0
        %v1272 = vpop.f32.mrb[0].mxu0
        %1273 = vdwg.mxu0
        %1274 = vmatprep.subr.bf16.mxu0 %v541
        %1275 = vmatpush1.bf16.msra.mxu0 %v540
        %1276 = vmatprep.subr.bf16.mxu0 %v545
        %1277 = vmatpush1.bf16.msra.mxu0 %v544
        %1278 = vmatprep.subr.bf16.mxu0 %v549
        %1279 = vmatpush1.bf16.msra.mxu0 %v548
        %1280 = vmatprep.subr.bf16.mxu0 %v553
        %1281 = vmatpush1.bf16.msra.mxu0 %v552
        %1282 = vmatprep.subr.bf16.mxu0 %v557
        %1283 = vmatpush1.bf16.msra.mxu0 %v556
        %1284 = vmatprep.subr.bf16.mxu0 %v561
        %1285 = vmatpush1.bf16.msra.mxu0 %v560
        %1286 = vmatprep.subr.bf16.mxu0 %v565
        %1287 = vmatpush1.bf16.msra.mxu0 %v564
        %1288 = vmatprep.subr.bf16.mxu0 %v569
        %1289 = vmatpush1.bf16.msra.mxu0 %v568
        %1290 = vmatprep.subr.bf16.mxu0 0
        %1291 = vmatpush1.bf16.msra.mxu0 0
        %1292 = vmatprep.subr.bf16.mxu0 0
        %1293 = vmatpush1.bf16.msra.mxu0 0
        %1294 = vmatprep.subr.bf16.mxu0 0
        %1295 = vmatpush1.bf16.msra.mxu0 0
        %1296 = vmatprep.subr.bf16.mxu0 0
        %1297 = vmatpush1.bf16.msra.mxu0 0
        %1298 = vmatprep.subr.bf16.mxu0 0
        %1299 = vmatpush1.bf16.msra.mxu0 0
        %1300 = vmatprep.subr.bf16.mxu0 0
        %1301 = vmatpush1.bf16.msra.mxu0 0
        %1302 = vmatprep.subr.bf16.mxu0 0
        %1303 = vmatpush1.bf16.msra.mxu0 0
        %1304 = vmatprep.subr.bf16.mxu0 0
        %1305 = vmatpush1.bf16.msra.mxu0 0
        %1306 = vmatprep.mubr.bf16.mxu0 0
        %1307 = vmatmul.mubr.bf16.gmra.mrb[0].mxu0 %v712
        %v1308 = vpop.f32.mrb[0].mxu0
        %v1309 = vadd.f32 0.0, %v1308
        %v1310 = vpop.f32.mrb[0].mxu0
        %v1311 = vadd.f32 0.0, %v1310
        %v1312 = vpop.f32.mrb[0].mxu0
        %v1313 = vpop.f32.mrb[0].mxu0
        %1314 = vdwg.mxu0
        %v1315 = vadd.f32 %v1229, %v1268
        %v1316 = vadd.f32 %v1230, %v1270
        %v1317 = vadd.f32 %v1231, %v1309
        %v1318 = vadd.f32 %v1232, %v1311
        %v1319 = vxor.u32 %v1315, 2147483648
        %v1320 = vmul.f32 %v1319, 1.442695
        %v1321 = vpow.pop %v1320
        %v1322 = vadd.f32 %v1321, 1.0
        %v1323 = vrcp.pop %v1322
        %v1324 = vmul.f32 1.0, %v1323
        %v1325 = vxor.u32 %v1316, 2147483648
        %v1326 = vmul.f32 %v1325, 1.442695
        %v1327 = vpow.pop %v1326
        %v1328 = vadd.f32 %v1327, 1.0
        %v1329 = vrcp.pop %v1328
        %v1330 = vmul.f32 1.0, %v1329
        %v1331 = vtanh.pop %v1317
        %v1332 = vxor.u32 %v1318, 2147483648
        %v1333 = vmul.f32 %v1332, 1.442695
        %v1334 = vpow.pop %v1333
        %v1335 = vadd.f32 %v1334, 1.0
        %v1336 = vrcp.pop %v1335
        %v1337 = vmul.f32 1.0, %v1336
        %v1338 = vmul.f32 %v1330, %v709
        %v1339 = vmul.f32 %v1324, %v1331
        %v1340 = vadd.f32 %v1338, %v1339
        %v1341 = vtanh.pop %v1340
        %v1342 = vmul.f32 %v1337, %v1341
        %v1343 = vpack.c.bf16 %v1342, %v1342
        %v1344 = vpack.c.bf16 %v1225, %v1225
        %1345 = vmatprep.subr.bf16.mxu0 %v993
        %1346 = vmatpush1.bf16.msra.mxu0 %v992
        %1347 = vmatprep.subr.bf16.mxu0 %v997
        %1348 = vmatpush1.bf16.msra.mxu0 %v996
        %1349 = vmatprep.subr.bf16.mxu0 %v1001
        %1350 = vmatpush1.bf16.msra.mxu0 %v1000
        %1351 = vmatprep.subr.bf16.mxu0 %v1005
        %1352 = vmatpush1.bf16.msra.mxu0 %v1004
        %1353 = vmatprep.subr.bf16.mxu0 %v1009
        %1354 = vmatpush1.bf16.msra.mxu0 %v1008
        %1355 = vmatprep.subr.bf16.mxu0 %v1013
        %1356 = vmatpush1.bf16.msra.mxu0 %v1012
        %1357 = vmatprep.subr.bf16.mxu0 %v1017
        %1358 = vmatpush1.bf16.msra.mxu0 %v1016
        %1359 = vmatprep.subr.bf16.mxu0 %v1021
        %1360 = vmatpush1.bf16.msra.mxu0 %v1020
        %1361 = vmatprep.subr.bf16.mxu0 %v1025
        %1362 = vmatpush1.bf16.msra.mxu0 %v1024
        %1363 = vmatprep.subr.bf16.mxu0 %v1029
        %1364 = vmatpush1.bf16.msra.mxu0 %v1028
        %1365 = vmatprep.subr.bf16.mxu0 %v1033
        %1366 = vmatpush1.bf16.msra.mxu0 %v1032
        %1367 = vmatprep.subr.bf16.mxu0 %v1037
        %1368 = vmatpush1.bf16.msra.mxu0 %v1036
        %1369 = vmatprep.subr.bf16.mxu0 %v1041
        %1370 = vmatpush1.bf16.msra.mxu0 %v1040
        %1371 = vmatprep.subr.bf16.mxu0 %v1045
        %1372 = vmatpush1.bf16.msra.mxu0 %v1044
        %1373 = vmatprep.subr.bf16.mxu0 %v1049
        %1374 = vmatpush1.bf16.msra.mxu0 %v1048
        %1375 = vmatprep.subr.bf16.mxu0 %v1053
        %1376 = vmatpush1.bf16.msra.mxu0 %v1052
        %1377 = vmatprep.mubr.bf16.mxu0 %v1344
        %1378 = vmatmul.mubr.bf16.gmra.mrb[0].mxu0 %v1343
        %v1379 = vpop.f32.mrb[0].mxu0
        %v1380 = vadd.f32 %v783, %v1379
        %v1381 = vpop.f32.mrb[0].mxu0
        %v1382 = vadd.f32 %v787, %v1381
        %v1383 = vpop.f32.mrb[0].mxu0
        %v1384 = vpop.f32.mrb[0].mxu0
        %1385 = vdwg.mxu0
        %1386 = vmatprep.subr.bf16.mxu0 %v995
        %1387 = vmatpush1.bf16.msra.mxu0 %v994
        %1388 = vmatprep.subr.bf16.mxu0 %v999
        %1389 = vmatpush1.bf16.msra.mxu0 %v998
        %1390 = vmatprep.subr.bf16.mxu0 %v1003
        %1391 = vmatpush1.bf16.msra.mxu0 %v1002
        %1392 = vmatprep.subr.bf16.mxu0 %v1007
        %1393 = vmatpush1.bf16.msra.mxu0 %v1006
        %1394 = vmatprep.subr.bf16.mxu0 %v1011
        %1395 = vmatpush1.bf16.msra.mxu0 %v1010
        %1396 = vmatprep.subr.bf16.mxu0 %v1015
        %1397 = vmatpush1.bf16.msra.mxu0 %v1014
        %1398 = vmatprep.subr.bf16.mxu0 %v1019
        %1399 = vmatpush1.bf16.msra.mxu0 %v1018
        %1400 = vmatprep.subr.bf16.mxu0 %v1023
        %1401 = vmatpush1.bf16.msra.mxu0 %v1022
        %1402 = vmatprep.subr.bf16.mxu0 %v1027
        %1403 = vmatpush1.bf16.msra.mxu0 %v1026
        %1404 = vmatprep.subr.bf16.mxu0 %v1031
        %1405 = vmatpush1.bf16.msra.mxu0 %v1030
        %1406 = vmatprep.subr.bf16.mxu0 %v1035
        %1407 = vmatpush1.bf16.msra.mxu0 %v1034
        %1408 = vmatprep.subr.bf16.mxu0 %v1039
        %1409 = vmatpush1.bf16.msra.mxu0 %v1038
        %1410 = vmatprep.subr.bf16.mxu0 %v1043
        %1411 = vmatpush1.bf16.msra.mxu0 %v1042
        %1412 = vmatprep.subr.bf16.mxu0 %v1047
        %1413 = vmatpush1.bf16.msra.mxu0 %v1046
        %1414 = vmatprep.subr.bf16.mxu0 %v1051
        %1415 = vmatpush1.bf16.msra.mxu0 %v1050
        %1416 = vmatprep.subr.bf16.mxu0 %v1055
        %1417 = vmatpush1.bf16.msra.mxu0 %v1054
        %1418 = vmatprep.mubr.bf16.mxu0 %v1344
        %1419 = vmatmul.mubr.bf16.gmra.mrb[0].mxu0 %v1343
        %v1420 = vpop.f32.mrb[0].mxu0
        %v1421 = vadd.f32 %v791, %v1420
        %v1422 = vpop.f32.mrb[0].mxu0
        %v1423 = vadd.f32 %v795, %v1422
        %v1424 = vpop.f32.mrb[0].mxu0
        %v1425 = vpop.f32.mrb[0].mxu0
        %1426 = vdwg.mxu0
        %v1427 = vxor.u32 %v1380, 2147483648
        %v1428 = vmul.f32 %v1427, 1.442695
        %v1429 = vpow.pop %v1428
        %v1430 = vadd.f32 %v1429, 1.0
        %v1431 = vrcp.pop %v1430
        %v1432 = vmul.f32 1.0, %v1431
        %v1433 = vxor.u32 %v1382, 2147483648
        %v1434 = vmul.f32 %v1433, 1.442695
        %v1435 = vpow.pop %v1434
        %v1436 = vadd.f32 %v1435, 1.0
        %v1437 = vrcp.pop %v1436
        %v1438 = vmul.f32 1.0, %v1437
        %v1439 = vtanh.pop %v1421
        %v1440 = vxor.u32 %v1423, 2147483648
        %v1441 = vmul.f32 %v1440, 1.442695
        %v1442 = vpow.pop %v1441
        %v1443 = vadd.f32 %v1442, 1.0
        %v1444 = vrcp.pop %v1443
        %v1445 = vmul.f32 1.0, %v1444
        %v1446 = vmul.f32 %v1438, %v1223
        %v1447 = vmul.f32 %v1432, %v1439
        %v1448 = vadd.f32 %v1446, %v1447
        %v1449 = vtanh.pop %v1448
        %v1450 = vmul.f32 %v1445, %v1449
        %s1451 = scalar_lea.vmem %s370, 32
        %v1452 = vld [vmem:[%s1451] sm:$0xff]
        %v1453 = vld [vmem:[%s1451 + $0x8] sm:$0xff]
        %v1454 = vunpack.c.l.bf16 %v1452
        %v1455 = vunpack.c.h.bf16 %v1452
        %v1456 = vunpack.c.l.bf16 %v1453
        %v1457 = vunpack.c.h.bf16 %v1453
        %1458 = vmatprep.subr.bf16.mxu0 %v539
        %1459 = vmatpush1.bf16.msra.mxu0 %v538
        %1460 = vmatprep.subr.bf16.mxu0 %v543
        %1461 = vmatpush1.bf16.msra.mxu0 %v542
        %1462 = vmatprep.subr.bf16.mxu0 %v547
        %1463 = vmatpush1.bf16.msra.mxu0 %v546
        %1464 = vmatprep.subr.bf16.mxu0 %v551
        %1465 = vmatpush1.bf16.msra.mxu0 %v550
        %1466 = vmatprep.subr.bf16.mxu0 %v555
        %1467 = vmatpush1.bf16.msra.mxu0 %v554
        %1468 = vmatprep.subr.bf16.mxu0 %v559
        %1469 = vmatpush1.bf16.msra.mxu0 %v558
        %1470 = vmatprep.subr.bf16.mxu0 %v563
        %1471 = vmatpush1.bf16.msra.mxu0 %v562
        %1472 = vmatprep.subr.bf16.mxu0 %v567
        %1473 = vmatpush1.bf16.msra.mxu0 %v566
        %1474 = vmatprep.subr.bf16.mxu0 0
        %1475 = vmatpush1.bf16.msra.mxu0 0
        %1476 = vmatprep.subr.bf16.mxu0 0
        %1477 = vmatpush1.bf16.msra.mxu0 0
        %1478 = vmatprep.subr.bf16.mxu0 0
        %1479 = vmatpush1.bf16.msra.mxu0 0
        %1480 = vmatprep.subr.bf16.mxu0 0
        %1481 = vmatpush1.bf16.msra.mxu0 0
        %1482 = vmatprep.subr.bf16.mxu0 0
        %1483 = vmatpush1.bf16.msra.mxu0 0
        %1484 = vmatprep.subr.bf16.mxu0 0
        %1485 = vmatpush1.bf16.msra.mxu0 0
        %1486 = vmatprep.subr.bf16.mxu0 0
        %1487 = vmatpush1.bf16.msra.mxu0 0
        %1488 = vmatprep.subr.bf16.mxu0 0
        %1489 = vmatpush1.bf16.msra.mxu0 0
        %1490 = vmatprep.mubr.bf16.mxu0 0
        %1491 = vmatmul.mubr.bf16.gmra.mrb[0].mxu0 %v1343
        %v1492 = vpop.f32.mrb[0].mxu0
        %v1493 = vadd.f32 0.0, %v1492
        %v1494 = vpop.f32.mrb[0].mxu0
        %v1495 = vadd.f32 0.0, %v1494
        %v1496 = vpop.f32.mrb[0].mxu0
        %v1497 = vpop.f32.mrb[0].mxu0
        %1498 = vdwg.mxu0
        %1499 = vmatprep.subr.bf16.mxu0 %v541
        %1500 = vmatpush1.bf16.msra.mxu0 %v540
        %1501 = vmatprep.subr.bf16.mxu0 %v545
        %1502 = vmatpush1.bf16.msra.mxu0 %v544
        %1503 = vmatprep.subr.bf16.mxu0 %v549
        %1504 = vmatpush1.bf16.msra.mxu0 %v548
        %1505 = vmatprep.subr.bf16.mxu0 %v553
        %1506 = vmatpush1.bf16.msra.mxu0 %v552
        %1507 = vmatprep.subr.bf16.mxu0 %v557
        %1508 = vmatpush1.bf16.msra.mxu0 %v556
        %1509 = vmatprep.subr.bf16.mxu0 %v561
        %1510 = vmatpush1.bf16.msra.mxu0 %v560
        %1511 = vmatprep.subr.bf16.mxu0 %v565
        %1512 = vmatpush1.bf16.msra.mxu0 %v564
        %1513 = vmatprep.subr.bf16.mxu0 %v569
        %1514 = vmatpush1.bf16.msra.mxu0 %v568
        %1515 = vmatprep.subr.bf16.mxu0 0
        %1516 = vmatpush1.bf16.msra.mxu0 0
        %1517 = vmatprep.subr.bf16.mxu0 0
        %1518 = vmatpush1.bf16.msra.mxu0 0
        %1519 = vmatprep.subr.bf16.mxu0 0
        %1520 = vmatpush1.bf16.msra.mxu0 0
        %1521 = vmatprep.subr.bf16.mxu0 0
        %1522 = vmatpush1.bf16.msra.mxu0 0
        %1523 = vmatprep.subr.bf16.mxu0 0
        %1524 = vmatpush1.bf16.msra.mxu0 0
        %1525 = vmatprep.subr.bf16.mxu0 0
        %1526 = vmatpush1.bf16.msra.mxu0 0
        %1527 = vmatprep.subr.bf16.mxu0 0
        %1528 = vmatpush1.bf16.msra.mxu0 0
        %1529 = vmatprep.subr.bf16.mxu0 0
        %1530 = vmatpush1.bf16.msra.mxu0 0
        %1531 = vmatprep.mubr.bf16.mxu0 0
        %1532 = vmatmul.mubr.bf16.gmra.mrb[0].mxu0 %v1343
        %v1533 = vpop.f32.mrb[0].mxu0
        %v1534 = vadd.f32 0.0, %v1533
        %v1535 = vpop.f32.mrb[0].mxu0
        %v1536 = vadd.f32 0.0, %v1535
        %v1537 = vpop.f32.mrb[0].mxu0
        %v1538 = vpop.f32.mrb[0].mxu0
        %1539 = vdwg.mxu0
        %v1540 = vadd.f32 %v1454, %v1493
        %v1541 = vadd.f32 %v1455, %v1495
        %v1542 = vadd.f32 %v1456, %v1534
        %v1543 = vadd.f32 %v1457, %v1536
        %v1544 = vxor.u32 %v1540, 2147483648
        %v1545 = vmul.f32 %v1544, 1.442695
        %v1546 = vpow.pop %v1545
        %v1547 = vadd.f32 %v1546, 1.0
        %v1548 = vrcp.pop %v1547
        %v1549 = vmul.f32 1.0, %v1548
        %v1550 = vxor.u32 %v1541, 2147483648
        %v1551 = vmul.f32 %v1550, 1.442695
        %v1552 = vpow.pop %v1551
        %v1553 = vadd.f32 %v1552, 1.0
        %v1554 = vrcp.pop %v1553
        %v1555 = vmul.f32 1.0, %v1554
        %v1556 = vtanh.pop %v1542
        %v1557 = vxor.u32 %v1543, 2147483648
        %v1558 = vmul.f32 %v1557, 1.442695
        %v1559 = vpow.pop %v1558
        %v1560 = vadd.f32 %v1559, 1.0
        %v1561 = vrcp.pop %v1560
        %v1562 = vmul.f32 1.0, %v1561
        %v1563 = vmul.f32 %v1555, %v1340
        %v1564 = vmul.f32 %v1549, %v1556
        %v1565 = vadd.f32 %v1563, %v1564
        %v1566 = vtanh.pop %v1565
        %v1567 = vmul.f32 %v1562, %v1566
        %v1568 = vpack.c.bf16 %v1567, %v1567
        %v1569 = vpack.c.bf16 %v1450, %v1450
        %1570 = vmatprep.subr.bf16.mxu0 %v993
        %1571 = vmatpush1.bf16.msra.mxu0 %v992
        %1572 = vmatprep.subr.bf16.mxu0 %v997
        %1573 = vmatpush1.bf16.msra.mxu0 %v996
        %1574 = vmatprep.subr.bf16.mxu0 %v1001
        %1575 = vmatpush1.bf16.msra.mxu0 %v1000
        %1576 = vmatprep.subr.bf16.mxu0 %v1005
        %1577 = vmatpush1.bf16.msra.mxu0 %v1004
        %1578 = vmatprep.subr.bf16.mxu0 %v1009
        %1579 = vmatpush1.bf16.msra.mxu0 %v1008
        %1580 = vmatprep.subr.bf16.mxu0 %v1013
        %1581 = vmatpush1.bf16.msra.mxu0 %v1012
        %1582 = vmatprep.subr.bf16.mxu0 %v1017
        %1583 = vmatpush1.bf16.msra.mxu0 %v1016
        %1584 = vmatprep.subr.bf16.mxu0 %v1021
        %1585 = vmatpush1.bf16.msra.mxu0 %v1020
        %1586 = vmatprep.subr.bf16.mxu0 %v1025
        %1587 = vmatpush1.bf16.msra.mxu0 %v1024
        %1588 = vmatprep.subr.bf16.mxu0 %v1029
        %1589 = vmatpush1.bf16.msra.mxu0 %v1028
        %1590 = vmatprep.subr.bf16.mxu0 %v1033
        %1591 = vmatpush1.bf16.msra.mxu0 %v1032
        %1592 = vmatprep.subr.bf16.mxu0 %v1037
        %1593 = vmatpush1.bf16.msra.mxu0 %v1036
        %1594 = vmatprep.subr.bf16.mxu0 %v1041
        %1595 = vmatpush1.bf16.msra.mxu0 %v1040
        %1596 = vmatprep.subr.bf16.mxu0 %v1045
        %1597 = vmatpush1.bf16.msra.mxu0 %v1044
        %1598 = vmatprep.subr.bf16.mxu0 %v1049
        %1599 = vmatpush1.bf16.msra.mxu0 %v1048
        %1600 = vmatprep.subr.bf16.mxu0 %v1053
        %1601 = vmatpush1.bf16.msra.mxu0 %v1052
        %1602 = vmatprep.mubr.bf16.mxu0 %v1569
        %1603 = vmatmul.mubr.bf16.gmra.mrb[0].mxu0 %v1568
        %v1604 = vpop.f32.mrb[0].mxu0
        %v1605 = vadd.f32 %v783, %v1604
        %v1606 = vpop.f32.mrb[0].mxu0
        %v1607 = vadd.f32 %v787, %v1606
        %v1608 = vpop.f32.mrb[0].mxu0
        %v1609 = vpop.f32.mrb[0].mxu0
        %1610 = vdwg.mxu0
        %1611 = vmatprep.subr.bf16.mxu0 %v995
        %1612 = vmatpush1.bf16.msra.mxu0 %v994
        %1613 = vmatprep.subr.bf16.mxu0 %v999
        %1614 = vmatpush1.bf16.msra.mxu0 %v998
        %1615 = vmatprep.subr.bf16.mxu0 %v1003
        %1616 = vmatpush1.bf16.msra.mxu0 %v1002
        %1617 = vmatprep.subr.bf16.mxu0 %v1007
        %1618 = vmatpush1.bf16.msra.mxu0 %v1006
        %1619 = vmatprep.subr.bf16.mxu0 %v1011
        %1620 = vmatpush1.bf16.msra.mxu0 %v1010
        %1621 = vmatprep.subr.bf16.mxu0 %v1015
        %1622 = vmatpush1.bf16.msra.mxu0 %v1014
        %1623 = vmatprep.subr.bf16.mxu0 %v1019
        %1624 = vmatpush1.bf16.msra.mxu0 %v1018
        %1625 = vmatprep.subr.bf16.mxu0 %v1023
        %1626 = vmatpush1.bf16.msra.mxu0 %v1022
        %1627 = vmatprep.subr.bf16.mxu0 %v1027
        %1628 = vmatpush1.bf16.msra.mxu0 %v1026
        %1629 = vmatprep.subr.bf16.mxu0 %v1031
        %1630 = vmatpush1.bf16.msra.mxu0 %v1030
        %1631 = vmatprep.subr.bf16.mxu0 %v1035
        %1632 = vmatpush1.bf16.msra.mxu0 %v1034
        %1633 = vmatprep.subr.bf16.mxu0 %v1039
        %1634 = vmatpush1.bf16.msra.mxu0 %v1038
        %1635 = vmatprep.subr.bf16.mxu0 %v1043
        %1636 = vmatpush1.bf16.msra.mxu0 %v1042
        %1637 = vmatprep.subr.bf16.mxu0 %v1047
        %1638 = vmatpush1.bf16.msra.mxu0 %v1046
        %1639 = vmatprep.subr.bf16.mxu0 %v1051
        %1640 = vmatpush1.bf16.msra.mxu0 %v1050
        %1641 = vmatprep.subr.bf16.mxu0 %v1055
        %1642 = vmatpush1.bf16.msra.mxu0 %v1054
        %1643 = vmatprep.mubr.bf16.mxu0 %v1569
        %1644 = vmatmul.mubr.bf16.gmra.mrb[0].mxu0 %v1568
        %v1645 = vpop.f32.mrb[0].mxu0
        %v1646 = vadd.f32 %v791, %v1645
        %v1647 = vpop.f32.mrb[0].mxu0
        %v1648 = vadd.f32 %v795, %v1647
        %v1649 = vpop.f32.mrb[0].mxu0
        %v1650 = vpop.f32.mrb[0].mxu0
        %1651 = vdwg.mxu0
        %v1652 = vxor.u32 %v1605, 2147483648
        %v1653 = vmul.f32 %v1652, 1.442695
        %v1654 = vpow.pop %v1653
        %v1655 = vadd.f32 %v1654, 1.0
        %v1656 = vrcp.pop %v1655
        %v1657 = vmul.f32 1.0, %v1656
        %v1658 = vxor.u32 %v1607, 2147483648
        %v1659 = vmul.f32 %v1658, 1.442695
        %v1660 = vpow.pop %v1659
        %v1661 = vadd.f32 %v1660, 1.0
        %v1662 = vrcp.pop %v1661
        %v1663 = vmul.f32 1.0, %v1662
        %v1664 = vtanh.pop %v1646
        %v1665 = vxor.u32 %v1648, 2147483648
        %v1666 = vmul.f32 %v1665, 1.442695
        %v1667 = vpow.pop %v1666
        %v1668 = vadd.f32 %v1667, 1.0
        %v1669 = vrcp.pop %v1668
        %v1670 = vmul.f32 1.0, %v1669
        %v1671 = vmul.f32 %v1663, %v1448
        %v1672 = vmul.f32 %v1657, %v1664
        %v1673 = vadd.f32 %v1671, %v1672
        %v1674 = vtanh.pop %v1673
        %v1675 = vmul.f32 %v1670, %v1674
        %s1676 = scalar_lea.vmem %s370, 48
        %v1677 = vld [vmem:[%s1676] sm:$0xff]
        %v1678 = vld [vmem:[%s1676 + $0x8] sm:$0xff]
        %v1679 = vunpack.c.l.bf16 %v1677
        %v1680 = vunpack.c.h.bf16 %v1677
        %v1681 = vunpack.c.l.bf16 %v1678
        %v1682 = vunpack.c.h.bf16 %v1678
        %1683 = vmatprep.subr.bf16.mxu0 %v539
        %1684 = vmatpush1.bf16.msra.mxu0 %v538
        %1685 = vmatprep.subr.bf16.mxu0 %v543
        %1686 = vmatpush1.bf16.msra.mxu0 %v542
        %1687 = vmatprep.subr.bf16.mxu0 %v547
        %1688 = vmatpush1.bf16.msra.mxu0 %v546
        %1689 = vmatprep.subr.bf16.mxu0 %v551
        %1690 = vmatpush1.bf16.msra.mxu0 %v550
        %1691 = vmatprep.subr.bf16.mxu0 %v555
        %1692 = vmatpush1.bf16.msra.mxu0 %v554
        %1693 = vmatprep.subr.bf16.mxu0 %v559
        %1694 = vmatpush1.bf16.msra.mxu0 %v558
        %1695 = vmatprep.subr.bf16.mxu0 %v563
        %1696 = vmatpush1.bf16.msra.mxu0 %v562
        %1697 = vmatprep.subr.bf16.mxu0 %v567
        %1698 = vmatpush1.bf16.msra.mxu0 %v566
        %1699 = vmatprep.subr.bf16.mxu0 0
        %1700 = vmatpush1.bf16.msra.mxu0 0
        %1701 = vmatprep.subr.bf16.mxu0 0
        %1702 = vmatpush1.bf16.msra.mxu0 0
        %1703 = vmatprep.subr.bf16.mxu0 0
        %1704 = vmatpush1.bf16.msra.mxu0 0
        %1705 = vmatprep.subr.bf16.mxu0 0
        %1706 = vmatpush1.bf16.msra.mxu0 0
        %1707 = vmatprep.subr.bf16.mxu0 0
        %1708 = vmatpush1.bf16.msra.mxu0 0
        %1709 = vmatprep.subr.bf16.mxu0 0
        %1710 = vmatpush1.bf16.msra.mxu0 0
        %1711 = vmatprep.subr.bf16.mxu0 0
        %1712 = vmatpush1.bf16.msra.mxu0 0
        %1713 = vmatprep.subr.bf16.mxu0 0
        %1714 = vmatpush1.bf16.msra.mxu0 0
        %1715 = vmatprep.mubr.bf16.mxu0 0
        %1716 = vmatmul.mubr.bf16.gmra.mrb[0].mxu0 %v1568
        %v1717 = vpop.f32.mrb[0].mxu0
        %v1718 = vadd.f32 0.0, %v1717
        %v1719 = vpop.f32.mrb[0].mxu0
        %v1720 = vadd.f32 0.0, %v1719
        %v1721 = vpop.f32.mrb[0].mxu0
        %v1722 = vpop.f32.mrb[0].mxu0
        %1723 = vdwg.mxu0
        %1724 = vmatprep.subr.bf16.mxu0 %v541
        %1725 = vmatpush1.bf16.msra.mxu0 %v540
        %1726 = vmatprep.subr.bf16.mxu0 %v545
        %1727 = vmatpush1.bf16.msra.mxu0 %v544
        %1728 = vmatprep.subr.bf16.mxu0 %v549
        %1729 = vmatpush1.bf16.msra.mxu0 %v548
        %1730 = vmatprep.subr.bf16.mxu0 %v553
        %1731 = vmatpush1.bf16.msra.mxu0 %v552
        %1732 = vmatprep.subr.bf16.mxu0 %v557
        %1733 = vmatpush1.bf16.msra.mxu0 %v556
        %1734 = vmatprep.subr.bf16.mxu0 %v561
        %1735 = vmatpush1.bf16.msra.mxu0 %v560
        %1736 = vmatprep.subr.bf16.mxu0 %v565
        %1737 = vmatpush1.bf16.msra.mxu0 %v564
        %1738 = vmatprep.subr.bf16.mxu0 %v569
        %1739 = vmatpush1.bf16.msra.mxu0 %v568
        %1740 = vmatprep.subr.bf16.mxu0 0
        %1741 = vmatpush1.bf16.msra.mxu0 0
        %1742 = vmatprep.subr.bf16.mxu0 0
        %1743 = vmatpush1.bf16.msra.mxu0 0
        %1744 = vmatprep.subr.bf16.mxu0 0
        %1745 = vmatpush1.bf16.msra.mxu0 0
        %1746 = vmatprep.subr.bf16.mxu0 0
        %1747 = vmatpush1.bf16.msra.mxu0 0
        %1748 = vmatprep.subr.bf16.mxu0 0
        %1749 = vmatpush1.bf16.msra.mxu0 0
        %1750 = vmatprep.subr.bf16.mxu0 0
        %1751 = vmatpush1.bf16.msra.mxu0 0
        %1752 = vmatprep.subr.bf16.mxu0 0
        %1753 = vmatpush1.bf16.msra.mxu0 0
        %1754 = vmatprep.subr.bf16.mxu0 0
        %1755 = vmatpush1.bf16.msra.mxu0 0
        %1756 = vmatprep.mubr.bf16.mxu0 0
        %1757 = vmatmul.mubr.bf16.gmra.mrb[0].mxu0 %v1568
        %v1758 = vpop.f32.mrb[0].mxu0
        %v1759 = vadd.f32 0.0, %v1758
        %v1760 = vpop.f32.mrb[0].mxu0
        %v1761 = vadd.f32 0.0, %v1760
        %v1762 = vpop.f32.mrb[0].mxu0
        %v1763 = vpop.f32.mrb[0].mxu0
        %1764 = vdwg.mxu0
        %v1765 = vadd.f32 %v1679, %v1718
        %v1766 = vadd.f32 %v1680, %v1720
        %v1767 = vadd.f32 %v1681, %v1759
        %v1768 = vadd.f32 %v1682, %v1761
        %v1769 = vxor.u32 %v1765, 2147483648
        %v1770 = vmul.f32 %v1769, 1.442695
        %v1771 = vpow.pop %v1770
        %v1772 = vadd.f32 %v1771, 1.0
        %v1773 = vrcp.pop %v1772
        %v1774 = vmul.f32 1.0, %v1773
        %v1775 = vxor.u32 %v1766, 2147483648
        %v1776 = vmul.f32 %v1775, 1.442695
        %v1777 = vpow.pop %v1776
        %v1778 = vadd.f32 %v1777, 1.0
        %v1779 = vrcp.pop %v1778
        %v1780 = vmul.f32 1.0, %v1779
        %v1781 = vtanh.pop %v1767
        %v1782 = vxor.u32 %v1768, 2147483648
        %v1783 = vmul.f32 %v1782, 1.442695
        %v1784 = vpow.pop %v1783
        %v1785 = vadd.f32 %v1784, 1.0
        %v1786 = vrcp.pop %v1785
        %v1787 = vmul.f32 1.0, %v1786
        %v1788 = vmul.f32 %v1780, %v1565
        %v1789 = vmul.f32 %v1774, %v1781
        %v1790 = vadd.f32 %v1788, %v1789
        %v1791 = vtanh.pop %v1790
        %v1792 = vmul.f32 %v1787, %v1791
        %v1793 = vpack.c.bf16 %v1792, %v1792
        %v1794 = vpack.c.bf16 %v1675, %v1675
        %1795 = vmatprep.subr.bf16.mxu0 %v993
        %1796 = vmatpush1.bf16.msra.mxu0 %v992
        %1797 = vmatprep.subr.bf16.mxu0 %v997
        %1798 = vmatpush1.bf16.msra.mxu0 %v996
        %1799 = vmatprep.subr.bf16.mxu0 %v1001
        %1800 = vmatpush1.bf16.msra.mxu0 %v1000
        %1801 = vmatprep.subr.bf16.mxu0 %v1005
        %1802 = vmatpush1.bf16.msra.mxu0 %v1004
        %1803 = vmatprep.subr.bf16.mxu0 %v1009
        %1804 = vmatpush1.bf16.msra.mxu0 %v1008
        %1805 = vmatprep.subr.bf16.mxu0 %v1013
        %1806 = vmatpush1.bf16.msra.mxu0 %v1012
        %1807 = vmatprep.subr.bf16.mxu0 %v1017
        %1808 = vmatpush1.bf16.msra.mxu0 %v1016
        %1809 = vmatprep.subr.bf16.mxu0 %v1021
        %1810 = vmatpush1.bf16.msra.mxu0 %v1020
        %1811 = vmatprep.subr.bf16.mxu0 %v1025
        %1812 = vmatpush1.bf16.msra.mxu0 %v1024
        %1813 = vmatprep.subr.bf16.mxu0 %v1029
        %1814 = vmatpush1.bf16.msra.mxu0 %v1028
        %1815 = vmatprep.subr.bf16.mxu0 %v1033
        %1816 = vmatpush1.bf16.msra.mxu0 %v1032
        %1817 = vmatprep.subr.bf16.mxu0 %v1037
        %1818 = vmatpush1.bf16.msra.mxu0 %v1036
        %1819 = vmatprep.subr.bf16.mxu0 %v1041
        %1820 = vmatpush1.bf16.msra.mxu0 %v1040
        %1821 = vmatprep.subr.bf16.mxu0 %v1045
        %1822 = vmatpush1.bf16.msra.mxu0 %v1044
        %1823 = vmatprep.subr.bf16.mxu0 %v1049
        %1824 = vmatpush1.bf16.msra.mxu0 %v1048
        %1825 = vmatprep.subr.bf16.mxu0 %v1053
        %1826 = vmatpush1.bf16.msra.mxu0 %v1052
        %1827 = vmatprep.mubr.bf16.mxu0 %v1794
        %1828 = vmatmul.mubr.bf16.gmra.mrb[0].mxu0 %v1793
        %v1829 = vpop.f32.mrb[0].mxu0
        %v1830 = vadd.f32 %v783, %v1829
        %v1831 = vpop.f32.mrb[0].mxu0
        %v1832 = vadd.f32 %v787, %v1831
        %v1833 = vpop.f32.mrb[0].mxu0
        %v1834 = vpop.f32.mrb[0].mxu0
        %1835 = vdwg.mxu0
        %1836 = vmatprep.subr.bf16.mxu0 %v995
        %1837 = vmatpush1.bf16.msra.mxu0 %v994
        %1838 = vmatprep.subr.bf16.mxu0 %v999
        %1839 = vmatpush1.bf16.msra.mxu0 %v998
        %1840 = vmatprep.subr.bf16.mxu0 %v1003
        %1841 = vmatpush1.bf16.msra.mxu0 %v1002
        %1842 = vmatprep.subr.bf16.mxu0 %v1007
        %1843 = vmatpush1.bf16.msra.mxu0 %v1006
        %1844 = vmatprep.subr.bf16.mxu0 %v1011
        %1845 = vmatpush1.bf16.msra.mxu0 %v1010
        %1846 = vmatprep.subr.bf16.mxu0 %v1015
        %1847 = vmatpush1.bf16.msra.mxu0 %v1014
        %1848 = vmatprep.subr.bf16.mxu0 %v1019
        %1849 = vmatpush1.bf16.msra.mxu0 %v1018
        %1850 = vmatprep.subr.bf16.mxu0 %v1023
        %1851 = vmatpush1.bf16.msra.mxu0 %v1022
        %1852 = vmatprep.subr.bf16.mxu0 %v1027
        %1853 = vmatpush1.bf16.msra.mxu0 %v1026
        %1854 = vmatprep.subr.bf16.mxu0 %v1031
        %1855 = vmatpush1.bf16.msra.mxu0 %v1030
        %1856 = vmatprep.subr.bf16.mxu0 %v1035
        %1857 = vmatpush1.bf16.msra.mxu0 %v1034
        %1858 = vmatprep.subr.bf16.mxu0 %v1039
        %1859 = vmatpush1.bf16.msra.mxu0 %v1038
        %1860 = vmatprep.subr.bf16.mxu0 %v1043
        %1861 = vmatpush1.bf16.msra.mxu0 %v1042
        %1862 = vmatprep.subr.bf16.mxu0 %v1047
        %1863 = vmatpush1.bf16.msra.mxu0 %v1046
        %1864 = vmatprep.subr.bf16.mxu0 %v1051
        %1865 = vmatpush1.bf16.msra.mxu0 %v1050
        %1866 = vmatprep.subr.bf16.mxu0 %v1055
        %1867 = vmatpush1.bf16.msra.mxu0 %v1054
        %1868 = vmatprep.mubr.bf16.mxu0 %v1794
        %1869 = vmatmul.mubr.bf16.gmra.mrb[0].mxu0 %v1793
        %v1870 = vpop.f32.mrb[0].mxu0
        %v1871 = vadd.f32 %v791, %v1870
        %v1872 = vpop.f32.mrb[0].mxu0
        %v1873 = vadd.f32 %v795, %v1872
        %v1874 = vpop.f32.mrb[0].mxu0
        %v1875 = vpop.f32.mrb[0].mxu0
        %1876 = vdwg.mxu0
        %v1877 = vxor.u32 %v1830, 2147483648
        %v1878 = vmul.f32 %v1877, 1.442695
        %v1879 = vpow.pop %v1878
        %v1880 = vadd.f32 %v1879, 1.0
        %v1881 = vrcp.pop %v1880
        %v1882 = vmul.f32 1.0, %v1881
        %v1883 = vxor.u32 %v1832, 2147483648
        %v1884 = vmul.f32 %v1883, 1.442695
        %v1885 = vpow.pop %v1884
        %v1886 = vadd.f32 %v1885, 1.0
        %v1887 = vrcp.pop %v1886
        %v1888 = vmul.f32 1.0, %v1887
        %v1889 = vtanh.pop %v1871
        %v1890 = vxor.u32 %v1873, 2147483648
        %v1891 = vmul.f32 %v1890, 1.442695
        %v1892 = vpow.pop %v1891
        %v1893 = vadd.f32 %v1892, 1.0
        %v1894 = vrcp.pop %v1893
        %v1895 = vmul.f32 1.0, %v1894
        %v1896 = vmul.f32 %v1888, %v1673
        %v1897 = vmul.f32 %v1882, %v1889
        %v1898 = vadd.f32 %v1896, %v1897
        %v1899 = vtanh.pop %v1898
        %v1900 = vmul.f32 %v1895, %v1899
        %1901 = vst [vmem:[#allocation2] sm:$0xff] %v1792
        %1902 = vst [vmem:[#allocation3] sm:$0xff] %v1790
        %1903 = vst [vmem:[%s398] sm:$0xff] %v1900
        %1904 = vst [vmem:[%s401] sm:$0xff] %v1898
        %p1905 = scmp.eq.s32.totalorder %s25, 1
        // Predicated region
        $region61: #{lstm_forward.1} parent=51 // pred_check
          %p1906 = pneg %p1905
        $region62: #{lstm_forward.1} parent=51 // pred_check_branch
          %1908 = sbr.rel (%p1906) target = $region64
        $region63: #{lstm_forward.1} parent=51 // pred_region
          %v1909 = vpack.c.bf16 %v1900, %v1900
          %v1910 = vld [vmem:[%s6] sm:$0xf]
          %v1911 = vld [vmem:[%s6 + $0x4] sm:$0xf]
          %v1912 = vld [vmem:[%s6 + $0x8] sm:$0xf]
          %v1913 = vld [vmem:[%s6 + $0xc] sm:$0xf]
          %v1914 = vld [vmem:[%s6 + $0x10] sm:$0xf]
          %v1915 = vld [vmem:[%s6 + $0x14] sm:$0xf]
          %v1916 = vld [vmem:[%s6 + $0x18] sm:$0xf]
          %v1917 = vld [vmem:[%s6 + $0x1c] sm:$0xf]
          %v1918 = vld [vmem:[%s6 + $0x20] sm:$0xf]
          %v1919 = vld [vmem:[%s6 + $0x24] sm:$0xf]
          %v1920 = vld [vmem:[%s6 + $0x28] sm:$0xf]
          %v1921 = vld [vmem:[%s6 + $0x2c] sm:$0xf]
          %v1922 = vld [vmem:[%s6 + $0x30] sm:$0xf]
          %v1923 = vld [vmem:[%s6 + $0x34] sm:$0xf]
          %v1924 = vld [vmem:[%s6 + $0x38] sm:$0xf]
          %v1925 = vld [vmem:[%s6 + $0x3c] sm:$0xf]
          %v1926 = vld [vmem:[%s7] sm:$0x1]
          %v1928 = vlaneseq
          %v1929 = vshrl.u32 %v1928, 7
          %v1930 = vsub.s32 0, %v1929
          %v1931 = vrot.slane %v1926, %v1930
          %v1949 = vunpack.c.l.b16 %v1910
          %v1950 = vunpack.c.l.b16 %v1911
          %v1951 = vunpack.c.l.b16 %v1912
          %v1952 = vunpack.c.l.b16 %v1913
          %v1953 = vunpack.c.l.b16 %v1914
          %v1954 = vunpack.c.l.b16 %v1915
          %v1955 = vunpack.c.l.b16 %v1916
          %v1956 = vunpack.c.l.b16 %v1917
          %v1957 = vunpack.c.l.b16 %v1918
          %v1958 = vunpack.c.l.b16 %v1919
          %v1959 = vunpack.c.l.b16 %v1920
          %v1960 = vunpack.c.l.b16 %v1921
          %v1961 = vunpack.c.l.b16 %v1922
          %v1962 = vunpack.c.l.b16 %v1923
          %v1963 = vunpack.c.l.b16 %v1924
          %v1964 = vunpack.c.l.b16 %v1925
          %v1965 = vpack.c.b16 %v1950, %v1949
          %v1966 = vpack.c.b16 %v1952, %v1951
          %v1967 = vpack.c.b16 %v1954, %v1953
          %v1968 = vpack.c.b16 %v1956, %v1955
          %v1969 = vpack.c.b16 %v1958, %v1957
          %v1970 = vpack.c.b16 %v1960, %v1959
          %v1971 = vpack.c.b16 %v1962, %v1961
          %v1972 = vpack.c.b16 %v1964, %v1963
          %1981 = vmatprep.subr.bf16.mxu0 0
          %1982 = vmatpush1.bf16.msra.mxu0 %v1965
          %1983 = vmatprep.subr.bf16.mxu0 0
          %1984 = vmatpush1.bf16.msra.mxu0 %v1966
          %1985 = vmatprep.subr.bf16.mxu0 0
          %1986 = vmatpush1.bf16.msra.mxu0 %v1967
          %1987 = vmatprep.subr.bf16.mxu0 0
          %1988 = vmatpush1.bf16.msra.mxu0 %v1968
          %1989 = vmatprep.subr.bf16.mxu0 0
          %1990 = vmatpush1.bf16.msra.mxu0 %v1969
          %1991 = vmatprep.subr.bf16.mxu0 0
          %1992 = vmatpush1.bf16.msra.mxu0 %v1970
          %1993 = vmatprep.subr.bf16.mxu0 0
          %1994 = vmatpush1.bf16.msra.mxu0 %v1971
          %1995 = vmatprep.subr.bf16.mxu0 0
          %1996 = vmatpush1.bf16.msra.mxu0 %v1972
          %1997 = vmatprep.subr.bf16.mxu0 0
          %1998 = vmatpush1.bf16.msra.mxu0 0
          %1999 = vmatprep.subr.bf16.mxu0 0
          %2000 = vmatpush1.bf16.msra.mxu0 0
          %2001 = vmatprep.subr.bf16.mxu0 0
          %2002 = vmatpush1.bf16.msra.mxu0 0
          %2003 = vmatprep.subr.bf16.mxu0 0
          %2004 = vmatpush1.bf16.msra.mxu0 0
          %2005 = vmatprep.subr.bf16.mxu0 0
          %2006 = vmatpush1.bf16.msra.mxu0 0
          %2007 = vmatprep.subr.bf16.mxu0 0
          %2008 = vmatpush1.bf16.msra.mxu0 0
          %2009 = vmatprep.subr.bf16.mxu0 0
          %2010 = vmatpush1.bf16.msra.mxu0 0
          %2011 = vmatprep.subr.bf16.mxu0 0
          %2012 = vmatpush1.bf16.msra.mxu0 0
          %2013 = vmatprep.mubr.bf16.mxu0 0
          %2014 = vmatmul.mubr.bf16.gmra.mrb[0].mxu0 %v1909
          %v2015 = vpop.f32.mrb[0].mxu0
          %v2016 = vadd.f32 %v1931, %v2015
          %v2017 = vpop.f32.mrb[0].mxu0
          %v2018 = vpop.f32.mrb[0].mxu0
          %v2019 = vpop.f32.mrb[0].mxu0
          %2020 = vdwg.mxu0
          %vm2021 = vcmask 23552
          %2022 = vst.msk [vmem:[%s383] sm:$0xff] %vm2021, %v2016
        $region64: #{lstm_forward.1} parent=51 // pred_fallthru
          _
        %p2023 = scmp.lt.s32.totalorder %s24, 0
        %s2024 = scalar_select %p2023, %s24, 0
        %s2025 = smul.addr %s2024, 8
        %s2026 = scalar_lea.vmem %s8, %s2025
        // Predicated region
        $region65: #{lstm_forward.1} parent=51 // pred_check
          %p2027 = pneg %p235
        $region66: #{lstm_forward.1} parent=51 // pred_check_branch
          %2029 = sbr.rel (%p2027) target = $region68
        $region67: #{lstm_forward.1} parent=51 // pred_region
          _
        $region68: #{lstm_forward.1} parent=51 // pred_fallthru
          _
        // Predicated region
        $region69: #{lstm_forward.1} parent=51 // pred_check
          %p2030 = pneg %p235
        $region70: #{lstm_forward.1} parent=51 // pred_check_branch
          %2032 = sbr.rel (%p2030) target = $region72
        $region71: #{lstm_forward.1} parent=51 // pred_region
          %p2033 = scmp.lt.s32.totalorder %s24, 0
          %s2034 = scalar_select %p2033, %s24, 0
          %s2035 = smul.addr %s2034, 8
          %s2036 = scalar_lea.vmem %s8, %s2035
        $region72: #{lstm_forward.1} parent=51 // pred_fallthru
          _
      $region52: #{lstm_forward.1} parent=5 // pred_fallthru
        _
      %p2037 = scmp.le.s32.totalorder 2, %s15
      // Predicated region
      $region73: #{lstm_forward.1} parent=5 // pred_check
        %p2038 = pneg %p2037
      $region74: #{lstm_forward.1} parent=5 // pred_check_branch
        %2040 = sbr.rel (%p2038) target = $region76
      $region75: #{lstm_forward.1} parent=5 // pred_region
        %s2041 = ssub.s32 %s15, 2
      $region76: #{lstm_forward.1} parent=5 // pred_fallthru
        _
    $region6: #{lstm_forward.1} parent=1 // loop_footer
      %s19 = sadd.s32 1, %s15
    $region7: #{lstm_forward.1} parent=1 // loop_footer_branch
      %14 = sbr.rel target = $region3
    $region8: #{lstm_forward.1} parent=1 // loop_exit
      _
    %2042 = vsyncpa [#allocation5], 1
    %s2043 = scalar_lea.sflag [#allocation5], 1
    %2044 = vsyncpa %s2043, 1

</llo_original>
